<compile_context>
chip_gen: v7x
topology: tpu7x:2x2x1
jax: 0.10.0
libtpu: 0.0.40
codegen_flags: <defaults>
</compile_context>

<pallas_src>
import functools

import jax
import jax.numpy as jnp
from jax import lax
from jax.experimental import pallas as pl
from jax.experimental.pallas import tpu as pltpu


def _transformer_block_kernel(num_heads, head_dim,
                              x_ref,
                              wqkv, bqkv,
                              wo, bo,
                              g1, be1,
                              w1, b1, w2, b2,
                              g2, be2,
                              out_ref):
    dt = x_ref.dtype               # matmul input dtype (f32 or bf16)
    D = num_heads * head_dim
    x = x_ref[0]                   # (S, D)
    S = x.shape[0]

    # Fused Q/K/V projection.  LoRA pairs are pre-merged and the
    # 1/sqrt(head_dim) scale is pre-folded into the Q block (see wrapper).
    qkv = jnp.dot(x, wqkv[...], preferred_element_type=jnp.float32) + bqkv[...]   # (S, 3D) f32
    q = qkv[:, :D]
    k = qkv[:, D:2 * D]
    v = qkv[:, 2 * D:]

    # Multi-head attention.  Per head: scores contract the shared head_dim
    # (no k.T relayout), f32 softmax with approximate EUP reciprocal, and the
    # head output is folded directly into the output projection — no
    # concatenate / per-head relayout copies.
    attn_acc = jnp.zeros((S, D), jnp.float32)
    for h in range(num_heads):
        lo = h * head_dim
        hi = lo + head_dim
        qh = q[:, lo:hi].astype(dt)
        kh = k[:, lo:hi].astype(dt)
        vh = v[:, lo:hi].astype(dt)
        s = lax.dot_general(qh, kh, (((1,), (1,)), ((), ())),
                            preferred_element_type=jnp.float32)                 # (S, S)
        s = s - jnp.max(s, axis=-1, keepdims=True)
        p = jnp.exp(s)
        p = p * pl.reciprocal(jnp.sum(p, axis=-1, keepdims=True), approx=True)
        o_h = jnp.dot(p.astype(dt), vh, preferred_element_type=jnp.float32)     # (S, hd)
        # concat_h(o_h) @ W_o == sum_h o_h @ W_o[h]  (wo is (H, hd, D))
        attn_acc = attn_acc + jnp.dot(o_h.astype(dt), wo[h],
                                      preferred_element_type=jnp.float32)       # (S, D)
    attn_out = attn_acc + bo[...]

    def layer_norm(z, g_r, b_r):
        mu = jnp.mean(z, axis=-1, keepdims=True)
        var = jnp.mean(jnp.square(z - mu), axis=-1, keepdims=True)
        return (z - mu) * lax.rsqrt(var + 1e-5) * g_r[...] + b_r[...]

    # TODO(synk): nn.Dropout is stochastic in train mode; implemented as identity (eval semantics).
    r1 = layer_norm(x.astype(jnp.float32) + attn_out, g1, be1)

    h1 = jnp.dot(r1.astype(dt), w1[...], preferred_element_type=jnp.float32) + b1[...]
    h1 = jnp.maximum(h1, 0.0)
    ff = jnp.dot(h1.astype(dt), w2[...], preferred_element_type=jnp.float32) + b2[...]

    out_ref[0] = layer_norm(r1 + ff, g2, be2).astype(out_ref.dtype)


def lora_transformer_block(x, params, *, num_heads, compute_dtype=jnp.float32):
    """x: (B, S, D).  params: PyTorch-equivalent weights in (in, out) layout."""
    B, S, D = x.shape
    head_dim = D // num_heads
    hp = lax.Precision.HIGHEST

    # ---- offline weight prep (per parameter set; exact up to fp reassociation) ----
    def merge_lora(n):
        wa, ba = params[f"w{n}_adp"], params[f"b{n}_adp"]   # (D, R), (1, R)
        wd, bd = params[f"w{n}_dec"], params[f"b{n}_dec"]   # (R, D), (1, D)
        w = jnp.matmul(wa, wd, precision=hp)                # effective (D, D)
        b = jnp.matmul(ba, wd, precision=hp) + bd           # effective (1, D)
        return w, b

    wq, bq = merge_lora("q")
    wk, bk = merge_lora("k")
    wv, bv = merge_lora("v")
    inv_scale = 1.0 / (head_dim ** 0.5)
    w_qkv = jnp.concatenate([wq * inv_scale, wk, wv], axis=1)      # (D, 3D)
    b_qkv = jnp.concatenate([bq * inv_scale, bk, bv], axis=1)      # (1, 3D)
    wo_h = params["wo"].reshape(num_heads, head_dim, D)            # per-head W_o slabs

    cd = jnp.dtype(compute_dtype)
    x_c = x.astype(cd)
    weights = [
        w_qkv.astype(cd), b_qkv,
        wo_h.astype(cd), params["bo"],
        params["ln1_g"], params["ln1_b"],
        params["ffn_w1"].astype(cd), params["ffn_b1"],
        params["ffn_w2"].astype(cd), params["ffn_b2"],
        params["ln2_g"], params["ln2_b"],
    ]

    def full_spec(arr):
        # Weights/biases stay fully VMEM-resident for all grid steps.
        return pl.BlockSpec(arr.shape, lambda b: (0,) * arr.ndim)

    in_specs = [pl.BlockSpec((1, S, D), lambda b: (b, 0, 0))] + [full_spec(w) for w in weights]
    out_specs = pl.BlockSpec((1, S, D), lambda b: (b, 0, 0))

    kernel = functools.partial(_transformer_block_kernel, num_heads, head_dim)

    wbytes = sum(int(w.size) * w.dtype.itemsize for w in weights)
    cost = pl.CostEstimate(
        flops=int(B * S * (24 * D * D + 4 * S * D)),
        transcendentals=int(B * num_heads * S * S + B * num_heads * S + 2 * B * S),
        bytes_accessed=int(wbytes + int(x_c.size) * cd.itemsize + B * S * D * 4),
    )

    return pl.pallas_call(
        kernel,
        out_shape=jax.ShapeDtypeStruct((B, S, D), jnp.float32),
        grid_spec=pltpu.PrefetchScalarGridSpec(
            num_scalar_prefetch=0,
            grid=(B,),
            in_specs=in_specs,
            out_specs=out_specs,
        ),
        compiler_params=pltpu.CompilerParams(
            dimension_semantics=("parallel",),
            vmem_limit_bytes=32 * 1024 * 1024,
        ),
        cost_estimate=cost,
    )(x_c, *weights)


def _xavier_uniform(key, shape_out_in):
    """Deterministic xavier-uniform for a PyTorch-style (out, in) weight."""
    fan_out, fan_in = shape_out_in
    limit = (6.0 / (fan_in + fan_out)) ** 0.5
    return jax.random.uniform(key, shape_out_in, jnp.float32, -limit, limit)


def init_params(key, hidden_dim, rank=16):
    D, R, F = hidden_dim, rank, 4 * hidden_dim
    keys = jax.random.split(key, 16)
    p = {}

    # loraLinear weights for W_q, W_k, W_v: adp (rank x D), dec (D x rank); biases zero.
    names = ["q", "k", "v"]
    for i, n in enumerate(names):
        wa = _xavier_uniform(keys[2 * i], (R, D))      # (out=R, in=D)
        wd = _xavier_uniform(keys[2 * i + 1], (D, R))  # (out=D, in=R)
        p[f"w{n}_adp"] = wa.T                          # store as (in, out)
        p[f"b{n}_adp"] = jnp.zeros((1, R), jnp.float32)
        p[f"w{n}_dec"] = wd.T
        p[f"b{n}_dec"] = jnp.zeros((1, D), jnp.float32)

    # W_o: xavier, zero bias.
    p["wo"] = _xavier_uniform(keys[6], (D, D)).T
    p["bo"] = jnp.zeros((1, D), jnp.float32)

    # LayerNorms: gamma=1, beta=0.
    p["ln1_g"] = jnp.ones((1, D), jnp.float32)
    p["ln1_b"] = jnp.zeros((1, D), jnp.float32)
    p["ln2_g"] = jnp.ones((1, D), jnp.float32)
    p["ln2_b"] = jnp.zeros((1, D), jnp.float32)

    # Feed-forward (PyTorch default init ~ U(-1/sqrt(fan_in), 1/sqrt(fan_in))).
    lim1 = 1.0 / (D ** 0.5)
    lim2 = 1.0 / (F ** 0.5)
    p["ffn_w1"] = jax.random.uniform(keys[7], (F, D), jnp.float32, -lim1, lim1).T
    p["ffn_b1"] = jax.random.uniform(keys[8], (1, F), jnp.float32, -lim1, lim1)
    p["ffn_w2"] = jax.random.uniform(keys[9], (D, F), jnp.float32, -lim2, lim2).T
    p["ffn_b2"] = jax.random.uniform(keys[10], (1, D), jnp.float32, -lim2, lim2)
    return p


def reference_forward(x, params, *, num_heads):
    """Plain-JAX reference mirroring the PyTorch forward (dropout = identity)."""
    B, S, D = x.shape
    hd = D // num_heads

    def lora(xin, wa, ba, wd, bd):
        return (xin @ wa + ba) @ wd + bd

    q = lora(x, params["wq_adp"], params["bq_adp"], params["wq_dec"], params["bq_dec"])
    k = lora(x, params["wk_adp"], params["bk_adp"], params["wk_dec"], params["bk_dec"])
    v = lora(x, params["wv_adp"], params["bv_adp"], params["wv_dec"], params["bv_dec"])

    q = q.reshape(B, S, num_heads, hd).transpose(0, 2, 1, 3)
    k = k.reshape(B, S, num_heads, hd).transpose(0, 2, 1, 3)
    v = v.reshape(B, S, num_heads, hd).transpose(0, 2, 1, 3)
    s = jnp.einsum("bhqd,bhkd->bhqk", q, k) / (hd ** 0.5)
    p = jax.nn.softmax(s, axis=-1)
    a = jnp.einsum("bhqk,bhkd->bhqd", p, v).transpose(0, 2, 1, 3).reshape(B, S, D)
    a = a @ params["wo"] + params["bo"]

    def ln(z, g, b):
        mu = jnp.mean(z, axis=-1, keepdims=True)
        var = jnp.mean((z - mu) ** 2, axis=-1, keepdims=True)
        return (z - mu) / jnp.sqrt(var + 1e-5) * g + b

    r1 = ln(x + a, params["ln1_g"], params["ln1_b"])
    ff = jnp.maximum(r1 @ params["ffn_w1"] + params["ffn_b1"], 0.0) @ params["ffn_w2"] + params["ffn_b2"]
    return ln(r1 + ff, params["ln2_g"], params["ln2_b"])


if __name__ == "__main__":
    B, S, D = 2, 8, 32
    NUM_HEADS = 4

    key = jax.random.PRNGKey(0)
    k_x, k_p = jax.random.split(key)
    x = jax.random.normal(k_x, (B, S, D), jnp.float32)
    params = init_params(k_p, D, rank=16)

    ref = reference_forward(x, params, num_heads=NUM_HEADS)

    # f32 matmul path.
    out = lora_transformer_block(x, params, num_heads=NUM_HEADS)
    out = jax.block_until_ready(out)
    assert out.shape == (B, S, D)
    # Tolerance covers the approximate EUP reciprocal in the softmax and the
    # offline LoRA merge (re-associated matmuls); real bugs show as O(0.1-1) errors.
    assert jnp.allclose(out, ref, atol=5e-3, rtol=5e-3), "f32 kernel mismatch vs. JAX reference"

    # bf16 matmul path (bf16 operands, f32 MXU accumulation, f32 softmax/LN).
    out_bf16 = lora_transformer_block(x, params, num_heads=NUM_HEADS,
                                      compute_dtype=jnp.bfloat16)
    out_bf16 = jax.block_until_ready(out_bf16)
    assert float(jnp.max(jnp.abs(out_bf16 - ref))) < 0.25, "bf16 kernel grossly off vs. reference"

    print("KERNEL_OK")
</pallas_src>

<mosaic_0001>
module attributes {stable_mosaic.version = 11 : i64} {
  func.func @_transformer_block_kernel(%arg0: i32, %arg1: memref<1x8x32xf32, #tpu.memory_space<vmem>>, %arg2: memref<32x96xf32, #tpu.memory_space<vmem>>, %arg3: memref<1x96xf32, #tpu.memory_space<vmem>>, %arg4: memref<4x8x32xf32, #tpu.memory_space<vmem>>, %arg5: memref<1x32xf32, #tpu.memory_space<vmem>>, %arg6: memref<1x32xf32, #tpu.memory_space<vmem>>, %arg7: memref<1x32xf32, #tpu.memory_space<vmem>>, %arg8: memref<32x128xf32, #tpu.memory_space<vmem>>, %arg9: memref<1x128xf32, #tpu.memory_space<vmem>>, %arg10: memref<128x32xf32, #tpu.memory_space<vmem>>, %arg11: memref<1x32xf32, #tpu.memory_space<vmem>>, %arg12: memref<1x32xf32, #tpu.memory_space<vmem>>, %arg13: memref<1x32xf32, #tpu.memory_space<vmem>>, %arg14: memref<1x8x32xf32, #tpu.memory_space<vmem>>) attributes {dimension_semantics = [#tpu.dimension_semantics<parallel>], iteration_bounds = array<i64: 2>, scalar_prefetch = 0 : i64, scratch_operands = 0 : i64, tpu.core_type = #tpu.core_type<tc>, window_params = [{transform_indices = @transform_0, window_bounds = array<i64: 1, 8, 32>}, {pipeline_mode = #tpu.pipeline_mode<synchronous>, transform_indices = @transform_1, window_bounds = array<i64: 32, 96>}, {pipeline_mode = #tpu.pipeline_mode<synchronous>, transform_indices = @transform_2, window_bounds = array<i64: 1, 96>}, {pipeline_mode = #tpu.pipeline_mode<synchronous>, transform_indices = @transform_3, window_bounds = array<i64: 4, 8, 32>}, {pipeline_mode = #tpu.pipeline_mode<synchronous>, transform_indices = @transform_4, window_bounds = array<i64: 1, 32>}, {pipeline_mode = #tpu.pipeline_mode<synchronous>, transform_indices = @transform_5, window_bounds = array<i64: 1, 32>}, {pipeline_mode = #tpu.pipeline_mode<synchronous>, transform_indices = @transform_6, window_bounds = array<i64: 1, 32>}, {pipeline_mode = #tpu.pipeline_mode<synchronous>, transform_indices = @transform_7, window_bounds = array<i64: 32, 128>}, {pipeline_mode = #tpu.pipeline_mode<synchronous>, transform_indices = @transform_8, window_bounds = array<i64: 1, 128>}, {pipeline_mode = #tpu.pipeline_mode<synchronous>, transform_indices = @transform_9, window_bounds = array<i64: 128, 32>}, {pipeline_mode = #tpu.pipeline_mode<synchronous>, transform_indices = @transform_10, window_bounds = array<i64: 1, 32>}, {pipeline_mode = #tpu.pipeline_mode<synchronous>, transform_indices = @transform_11, window_bounds = array<i64: 1, 32>}, {pipeline_mode = #tpu.pipeline_mode<synchronous>, transform_indices = @transform_12, window_bounds = array<i64: 1, 32>}, {transform_indices = @transform_13, window_bounds = array<i64: 1, 8, 32>}]} {
    %c0 = arith.constant 0 : index
    %c0_0 = arith.constant 0 : index
    %c0_1 = arith.constant 0 : index
    %0 = vector.load %arg1[%c0, %c0_0, %c0_1] : memref<1x8x32xf32, #tpu.memory_space<vmem>>, vector<1x8x32xf32>
    %1 = vector.shape_cast %0 : vector<1x8x32xf32> to vector<8x32xf32>
    %c0_2 = arith.constant 0 : index
    %c0_3 = arith.constant 0 : index
    %2 = vector.load %arg2[%c0_2, %c0_3] : memref<32x96xf32, #tpu.memory_space<vmem>>, vector<32x96xf32>
    %cst = arith.constant dense<0.000000e+00> : vector<8x96xf32>
    %3 = tpu.matmul %1, %2, %cst {dimension_numbers = #tpu.dot_dimension_numbers<[1], [0], [0], [1], [0, 0, 1, 1], [], []>} : vector<8x32xf32>, vector<32x96xf32>, vector<8x96xf32> -> vector<8x96xf32>
    %c0_4 = arith.constant 0 : index
    %c0_5 = arith.constant 0 : index
    %4 = vector.load %arg3[%c0_4, %c0_5] : memref<1x96xf32, #tpu.memory_space<vmem>>, vector<1x96xf32>
    %5 = vector.broadcast %4 : vector<1x96xf32> to vector<8x96xf32>
    %6 = arith.addf %3, %5 : vector<8x96xf32>
    %7 = vector.extract_strided_slice %6 {offsets = [0, 0], sizes = [8, 32], strides = [1, 1]} : vector<8x96xf32> to vector<8x32xf32>
    %8 = vector.extract_strided_slice %6 {offsets = [0, 32], sizes = [8, 32], strides = [1, 1]} : vector<8x96xf32> to vector<8x32xf32>
    %9 = vector.extract_strided_slice %6 {offsets = [0, 64], sizes = [8, 32], strides = [1, 1]} : vector<8x96xf32> to vector<8x32xf32>
    %cst_6 = arith.constant 0.000000e+00 : f32
    %10 = vector.broadcast %cst_6 : f32 to vector<8x32xf32>
    %11 = vector.extract_strided_slice %7 {offsets = [0, 0], sizes = [8, 8], strides = [1, 1]} : vector<8x32xf32> to vector<8x8xf32>
    %12 = vector.extract_strided_slice %8 {offsets = [0, 0], sizes = [8, 8], strides = [1, 1]} : vector<8x32xf32> to vector<8x8xf32>
    %13 = vector.extract_strided_slice %9 {offsets = [0, 0], sizes = [8, 8], strides = [1, 1]} : vector<8x32xf32> to vector<8x8xf32>
    %cst_7 = arith.constant dense<0.000000e+00> : vector<8x8xf32>
    %14 = tpu.matmul %11, %12, %cst_7 {dimension_numbers = #tpu.dot_dimension_numbers<[1], [1], [0], [0], [0, 0, 1, 0], [], []>} : vector<8x8xf32>, vector<8x8xf32>, vector<8x8xf32> -> vector<8x8xf32>
    %cst_8 = arith.constant dense<0xFF800000> : vector<8xf32>
    %15 = vector.multi_reduction <maximumf>, %14, %cst_8 [1] : vector<8x8xf32> to vector<8xf32>
    %16 = vector.shape_cast %15 : vector<8xf32> to vector<8x1xf32>
    %17 = vector.broadcast %16 : vector<8x1xf32> to vector<8x8xf32>
    %18 = arith.subf %14, %17 : vector<8x8xf32>
    %19 = math.exp %18 : vector<8x8xf32>
    %cst_9 = arith.constant dense<0.000000e+00> : vector<8xf32>
    %20 = vector.multi_reduction <add>, %19, %cst_9 [1] : vector<8x8xf32> to vector<8xf32>
    %21 = vector.shape_cast %20 : vector<8xf32> to vector<8x1xf32>
    %22 = tpu.reciprocal %21 {approx = true} : vector<8x1xf32> -> vector<8x1xf32>
    %23 = vector.broadcast %22 : vector<8x1xf32> to vector<8x8xf32>
    %24 = arith.mulf %19, %23 : vector<8x8xf32>
    %cst_10 = arith.constant dense<0.000000e+00> : vector<8x8xf32>
    %25 = tpu.matmul %24, %13, %cst_10 {dimension_numbers = #tpu.dot_dimension_numbers<[1], [0], [0], [1], [0, 0, 1, 1], [], []>} : vector<8x8xf32>, vector<8x8xf32>, vector<8x8xf32> -> vector<8x8xf32>
    %c0_11 = arith.constant 0 : index
    %c0_12 = arith.constant 0 : index
    %c0_13 = arith.constant 0 : index
    %26 = vector.load %arg4[%c0_11, %c0_12, %c0_13] : memref<4x8x32xf32, #tpu.memory_space<vmem>>, vector<1x8x32xf32>
    %27 = vector.shape_cast %26 : vector<1x8x32xf32> to vector<8x32xf32>
    %cst_14 = arith.constant dense<0.000000e+00> : vector<8x32xf32>
    %28 = tpu.matmul %25, %27, %cst_14 {dimension_numbers = #tpu.dot_dimension_numbers<[1], [0], [0], [1], [0, 0, 1, 1], [], []>} : vector<8x8xf32>, vector<8x32xf32>, vector<8x32xf32> -> vector<8x32xf32>
    %29 = arith.addf %10, %28 : vector<8x32xf32>
    %30 = vector.extract_strided_slice %7 {offsets = [0, 8], sizes = [8, 8], strides = [1, 1]} : vector<8x32xf32> to vector<8x8xf32>
    %31 = vector.extract_strided_slice %8 {offsets = [0, 8], sizes = [8, 8], strides = [1, 1]} : vector<8x32xf32> to vector<8x8xf32>
    %32 = vector.extract_strided_slice %9 {offsets = [0, 8], sizes = [8, 8], strides = [1, 1]} : vector<8x32xf32> to vector<8x8xf32>
    %cst_15 = arith.constant dense<0.000000e+00> : vector<8x8xf32>
    %33 = tpu.matmul %30, %31, %cst_15 {dimension_numbers = #tpu.dot_dimension_numbers<[1], [1], [0], [0], [0, 0, 1, 0], [], []>} : vector<8x8xf32>, vector<8x8xf32>, vector<8x8xf32> -> vector<8x8xf32>
    %cst_16 = arith.constant dense<0xFF800000> : vector<8xf32>
    %34 = vector.multi_reduction <maximumf>, %33, %cst_16 [1] : vector<8x8xf32> to vector<8xf32>
    %35 = vector.shape_cast %34 : vector<8xf32> to vector<8x1xf32>
    %36 = vector.broadcast %35 : vector<8x1xf32> to vector<8x8xf32>
    %37 = arith.subf %33, %36 : vector<8x8xf32>
    %38 = math.exp %37 : vector<8x8xf32>
    %cst_17 = arith.constant dense<0.000000e+00> : vector<8xf32>
    %39 = vector.multi_reduction <add>, %38, %cst_17 [1] : vector<8x8xf32> to vector<8xf32>
    %40 = vector.shape_cast %39 : vector<8xf32> to vector<8x1xf32>
    %41 = tpu.reciprocal %40 {approx = true} : vector<8x1xf32> -> vector<8x1xf32>
    %42 = vector.broadcast %41 : vector<8x1xf32> to vector<8x8xf32>
    %43 = arith.mulf %38, %42 : vector<8x8xf32>
    %cst_18 = arith.constant dense<0.000000e+00> : vector<8x8xf32>
    %44 = tpu.matmul %43, %32, %cst_18 {dimension_numbers = #tpu.dot_dimension_numbers<[1], [0], [0], [1], [0, 0, 1, 1], [], []>} : vector<8x8xf32>, vector<8x8xf32>, vector<8x8xf32> -> vector<8x8xf32>
    %c1 = arith.constant 1 : index
    %c0_19 = arith.constant 0 : index
    %c0_20 = arith.constant 0 : index
    %45 = vector.load %arg4[%c1, %c0_19, %c0_20] : memref<4x8x32xf32, #tpu.memory_space<vmem>>, vector<1x8x32xf32>
    %46 = vector.shape_cast %45 : vector<1x8x32xf32> to vector<8x32xf32>
    %cst_21 = arith.constant dense<0.000000e+00> : vector<8x32xf32>
    %47 = tpu.matmul %44, %46, %cst_21 {dimension_numbers = #tpu.dot_dimension_numbers<[1], [0], [0], [1], [0, 0, 1, 1], [], []>} : vector<8x8xf32>, vector<8x32xf32>, vector<8x32xf32> -> vector<8x32xf32>
    %48 = arith.addf %29, %47 : vector<8x32xf32>
    %49 = vector.extract_strided_slice %7 {offsets = [0, 16], sizes = [8, 8], strides = [1, 1]} : vector<8x32xf32> to vector<8x8xf32>
    %50 = vector.extract_strided_slice %8 {offsets = [0, 16], sizes = [8, 8], strides = [1, 1]} : vector<8x32xf32> to vector<8x8xf32>
    %51 = vector.extract_strided_slice %9 {offsets = [0, 16], sizes = [8, 8], strides = [1, 1]} : vector<8x32xf32> to vector<8x8xf32>
    %cst_22 = arith.constant dense<0.000000e+00> : vector<8x8xf32>
    %52 = tpu.matmul %49, %50, %cst_22 {dimension_numbers = #tpu.dot_dimension_numbers<[1], [1], [0], [0], [0, 0, 1, 0], [], []>} : vector<8x8xf32>, vector<8x8xf32>, vector<8x8xf32> -> vector<8x8xf32>
    %cst_23 = arith.constant dense<0xFF800000> : vector<8xf32>
    %53 = vector.multi_reduction <maximumf>, %52, %cst_23 [1] : vector<8x8xf32> to vector<8xf32>
    %54 = vector.shape_cast %53 : vector<8xf32> to vector<8x1xf32>
    %55 = vector.broadcast %54 : vector<8x1xf32> to vector<8x8xf32>
    %56 = arith.subf %52, %55 : vector<8x8xf32>
    %57 = math.exp %56 : vector<8x8xf32>
    %cst_24 = arith.constant dense<0.000000e+00> : vector<8xf32>
    %58 = vector.multi_reduction <add>, %57, %cst_24 [1] : vector<8x8xf32> to vector<8xf32>
    %59 = vector.shape_cast %58 : vector<8xf32> to vector<8x1xf32>
    %60 = tpu.reciprocal %59 {approx = true} : vector<8x1xf32> -> vector<8x1xf32>
    %61 = vector.broadcast %60 : vector<8x1xf32> to vector<8x8xf32>
    %62 = arith.mulf %57, %61 : vector<8x8xf32>
    %cst_25 = arith.constant dense<0.000000e+00> : vector<8x8xf32>
    %63 = tpu.matmul %62, %51, %cst_25 {dimension_numbers = #tpu.dot_dimension_numbers<[1], [0], [0], [1], [0, 0, 1, 1], [], []>} : vector<8x8xf32>, vector<8x8xf32>, vector<8x8xf32> -> vector<8x8xf32>
    %c2 = arith.constant 2 : index
    %c0_26 = arith.constant 0 : index
    %c0_27 = arith.constant 0 : index
    %64 = vector.load %arg4[%c2, %c0_26, %c0_27] : memref<4x8x32xf32, #tpu.memory_space<vmem>>, vector<1x8x32xf32>
    %65 = vector.shape_cast %64 : vector<1x8x32xf32> to vector<8x32xf32>
    %cst_28 = arith.constant dense<0.000000e+00> : vector<8x32xf32>
    %66 = tpu.matmul %63, %65, %cst_28 {dimension_numbers = #tpu.dot_dimension_numbers<[1], [0], [0], [1], [0, 0, 1, 1], [], []>} : vector<8x8xf32>, vector<8x32xf32>, vector<8x32xf32> -> vector<8x32xf32>
    %67 = arith.addf %48, %66 : vector<8x32xf32>
    %68 = vector.extract_strided_slice %7 {offsets = [0, 24], sizes = [8, 8], strides = [1, 1]} : vector<8x32xf32> to vector<8x8xf32>
    %69 = vector.extract_strided_slice %8 {offsets = [0, 24], sizes = [8, 8], strides = [1, 1]} : vector<8x32xf32> to vector<8x8xf32>
    %70 = vector.extract_strided_slice %9 {offsets = [0, 24], sizes = [8, 8], strides = [1, 1]} : vector<8x32xf32> to vector<8x8xf32>
    %cst_29 = arith.constant dense<0.000000e+00> : vector<8x8xf32>
    %71 = tpu.matmul %68, %69, %cst_29 {dimension_numbers = #tpu.dot_dimension_numbers<[1], [1], [0], [0], [0, 0, 1, 0], [], []>} : vector<8x8xf32>, vector<8x8xf32>, vector<8x8xf32> -> vector<8x8xf32>
    %cst_30 = arith.constant dense<0xFF800000> : vector<8xf32>
    %72 = vector.multi_reduction <maximumf>, %71, %cst_30 [1] : vector<8x8xf32> to vector<8xf32>
    %73 = vector.shape_cast %72 : vector<8xf32> to vector<8x1xf32>
    %74 = vector.broadcast %73 : vector<8x1xf32> to vector<8x8xf32>
    %75 = arith.subf %71, %74 : vector<8x8xf32>
    %76 = math.exp %75 : vector<8x8xf32>
    %cst_31 = arith.constant dense<0.000000e+00> : vector<8xf32>
    %77 = vector.multi_reduction <add>, %76, %cst_31 [1] : vector<8x8xf32> to vector<8xf32>
    %78 = vector.shape_cast %77 : vector<8xf32> to vector<8x1xf32>
    %79 = tpu.reciprocal %78 {approx = true} : vector<8x1xf32> -> vector<8x1xf32>
    %80 = vector.broadcast %79 : vector<8x1xf32> to vector<8x8xf32>
    %81 = arith.mulf %76, %80 : vector<8x8xf32>
    %cst_32 = arith.constant dense<0.000000e+00> : vector<8x8xf32>
    %82 = tpu.matmul %81, %70, %cst_32 {dimension_numbers = #tpu.dot_dimension_numbers<[1], [0], [0], [1], [0, 0, 1, 1], [], []>} : vector<8x8xf32>, vector<8x8xf32>, vector<8x8xf32> -> vector<8x8xf32>
    %c3 = arith.constant 3 : index
    %c0_33 = arith.constant 0 : index
    %c0_34 = arith.constant 0 : index
    %83 = vector.load %arg4[%c3, %c0_33, %c0_34] : memref<4x8x32xf32, #tpu.memory_space<vmem>>, vector<1x8x32xf32>
    %84 = vector.shape_cast %83 : vector<1x8x32xf32> to vector<8x32xf32>
    %cst_35 = arith.constant dense<0.000000e+00> : vector<8x32xf32>
    %85 = tpu.matmul %82, %84, %cst_35 {dimension_numbers = #tpu.dot_dimension_numbers<[1], [0], [0], [1], [0, 0, 1, 1], [], []>} : vector<8x8xf32>, vector<8x32xf32>, vector<8x32xf32> -> vector<8x32xf32>
    %86 = arith.addf %67, %85 : vector<8x32xf32>
    %c0_36 = arith.constant 0 : index
    %c0_37 = arith.constant 0 : index
    %87 = vector.load %arg5[%c0_36, %c0_37] : memref<1x32xf32, #tpu.memory_space<vmem>>, vector<1x32xf32>
    %88 = vector.broadcast %87 : vector<1x32xf32> to vector<8x32xf32>
    %89 = arith.addf %86, %88 : vector<8x32xf32>
    %90 = arith.addf %1, %89 : vector<8x32xf32>
    %cst_38 = arith.constant dense<0.000000e+00> : vector<8xf32>
    %91 = vector.multi_reduction <add>, %90, %cst_38 [1] : vector<8x32xf32> to vector<8xf32>
    %92 = vector.shape_cast %91 : vector<8xf32> to vector<8x1xf32>
    %cst_39 = arith.constant 3.200000e+01 : f32
    %93 = vector.broadcast %cst_39 : f32 to vector<8x1xf32>
    %94 = arith.divf %92, %93 : vector<8x1xf32>
    %95 = vector.broadcast %94 : vector<8x1xf32> to vector<8x32xf32>
    %96 = arith.subf %90, %95 : vector<8x32xf32>
    %97 = arith.mulf %96, %96 : vector<8x32xf32>
    %cst_40 = arith.constant dense<0.000000e+00> : vector<8xf32>
    %98 = vector.multi_reduction <add>, %97, %cst_40 [1] : vector<8x32xf32> to vector<8xf32>
    %99 = vector.shape_cast %98 : vector<8xf32> to vector<8x1xf32>
    %cst_41 = arith.constant 3.200000e+01 : f32
    %100 = vector.broadcast %cst_41 : f32 to vector<8x1xf32>
    %101 = arith.divf %99, %100 : vector<8x1xf32>
    %102 = vector.broadcast %94 : vector<8x1xf32> to vector<8x32xf32>
    %103 = arith.subf %90, %102 : vector<8x32xf32>
    %cst_42 = arith.constant 9.99999974E-6 : f32
    %104 = vector.broadcast %cst_42 : f32 to vector<8x1xf32>
    %105 = arith.addf %101, %104 : vector<8x1xf32>
    %106 = math.rsqrt %105 : vector<8x1xf32>
    %107 = vector.broadcast %106 : vector<8x1xf32> to vector<8x32xf32>
    %108 = arith.mulf %103, %107 : vector<8x32xf32>
    %c0_43 = arith.constant 0 : index
    %c0_44 = arith.constant 0 : index
    %109 = vector.load %arg6[%c0_43, %c0_44] : memref<1x32xf32, #tpu.memory_space<vmem>>, vector<1x32xf32>
    %110 = vector.broadcast %109 : vector<1x32xf32> to vector<8x32xf32>
    %111 = arith.mulf %108, %110 : vector<8x32xf32>
    %c0_45 = arith.constant 0 : index
    %c0_46 = arith.constant 0 : index
    %112 = vector.load %arg7[%c0_45, %c0_46] : memref<1x32xf32, #tpu.memory_space<vmem>>, vector<1x32xf32>
    %113 = vector.broadcast %112 : vector<1x32xf32> to vector<8x32xf32>
    %114 = arith.addf %111, %113 : vector<8x32xf32>
    %c0_47 = arith.constant 0 : index
    %c0_48 = arith.constant 0 : index
    %115 = vector.load %arg8[%c0_47, %c0_48] : memref<32x128xf32, #tpu.memory_space<vmem>>, vector<32x128xf32>
    %cst_49 = arith.constant dense<0.000000e+00> : vector<8x128xf32>
    %116 = tpu.matmul %114, %115, %cst_49 {dimension_numbers = #tpu.dot_dimension_numbers<[1], [0], [0], [1], [0, 0, 1, 1], [], []>} : vector<8x32xf32>, vector<32x128xf32>, vector<8x128xf32> -> vector<8x128xf32>
    %c0_50 = arith.constant 0 : index
    %c0_51 = arith.constant 0 : index
    %117 = vector.load %arg9[%c0_50, %c0_51] : memref<1x128xf32, #tpu.memory_space<vmem>>, vector<1x128xf32>
    %118 = vector.broadcast %117 : vector<1x128xf32> to vector<8x128xf32>
    %119 = arith.addf %116, %118 : vector<8x128xf32>
    %cst_52 = arith.constant 0.000000e+00 : f32
    %120 = vector.broadcast %cst_52 : f32 to vector<8x128xf32>
    %121 = arith.maximumf %119, %120 : vector<8x128xf32>
    %c0_53 = arith.constant 0 : index
    %c0_54 = arith.constant 0 : index
    %122 = vector.load %arg10[%c0_53, %c0_54] : memref<128x32xf32, #tpu.memory_space<vmem>>, vector<128x32xf32>
    %cst_55 = arith.constant dense<0.000000e+00> : vector<8x32xf32>
    %123 = tpu.matmul %121, %122, %cst_55 {dimension_numbers = #tpu.dot_dimension_numbers<[1], [0], [0], [1], [0, 0, 1, 1], [], []>} : vector<8x128xf32>, vector<128x32xf32>, vector<8x32xf32> -> vector<8x32xf32>
    %c0_56 = arith.constant 0 : index
    %c0_57 = arith.constant 0 : index
    %124 = vector.load %arg11[%c0_56, %c0_57] : memref<1x32xf32, #tpu.memory_space<vmem>>, vector<1x32xf32>
    %125 = vector.broadcast %124 : vector<1x32xf32> to vector<8x32xf32>
    %126 = arith.addf %123, %125 : vector<8x32xf32>
    %127 = arith.addf %114, %126 : vector<8x32xf32>
    %cst_58 = arith.constant dense<0.000000e+00> : vector<8xf32>
    %128 = vector.multi_reduction <add>, %127, %cst_58 [1] : vector<8x32xf32> to vector<8xf32>
    %129 = vector.shape_cast %128 : vector<8xf32> to vector<8x1xf32>
    %cst_59 = arith.constant 3.200000e+01 : f32
    %130 = vector.broadcast %cst_59 : f32 to vector<8x1xf32>
    %131 = arith.divf %129, %130 : vector<8x1xf32>
    %132 = vector.broadcast %131 : vector<8x1xf32> to vector<8x32xf32>
    %133 = arith.subf %127, %132 : vector<8x32xf32>
    %134 = arith.mulf %133, %133 : vector<8x32xf32>
    %cst_60 = arith.constant dense<0.000000e+00> : vector<8xf32>
    %135 = vector.multi_reduction <add>, %134, %cst_60 [1] : vector<8x32xf32> to vector<8xf32>
    %136 = vector.shape_cast %135 : vector<8xf32> to vector<8x1xf32>
    %cst_61 = arith.constant 3.200000e+01 : f32
    %137 = vector.broadcast %cst_61 : f32 to vector<8x1xf32>
    %138 = arith.divf %136, %137 : vector<8x1xf32>
    %139 = vector.broadcast %131 : vector<8x1xf32> to vector<8x32xf32>
    %140 = arith.subf %127, %139 : vector<8x32xf32>
    %cst_62 = arith.constant 9.99999974E-6 : f32
    %141 = vector.broadcast %cst_62 : f32 to vector<8x1xf32>
    %142 = arith.addf %138, %141 : vector<8x1xf32>
    %143 = math.rsqrt %142 : vector<8x1xf32>
    %144 = vector.broadcast %143 : vector<8x1xf32> to vector<8x32xf32>
    %145 = arith.mulf %140, %144 : vector<8x32xf32>
    %c0_63 = arith.constant 0 : index
    %c0_64 = arith.constant 0 : index
    %146 = vector.load %arg12[%c0_63, %c0_64] : memref<1x32xf32, #tpu.memory_space<vmem>>, vector<1x32xf32>
    %147 = vector.broadcast %146 : vector<1x32xf32> to vector<8x32xf32>
    %148 = arith.mulf %145, %147 : vector<8x32xf32>
    %c0_65 = arith.constant 0 : index
    %c0_66 = arith.constant 0 : index
    %149 = vector.load %arg13[%c0_65, %c0_66] : memref<1x32xf32, #tpu.memory_space<vmem>>, vector<1x32xf32>
    %150 = vector.broadcast %149 : vector<1x32xf32> to vector<8x32xf32>
    %151 = arith.addf %148, %150 : vector<8x32xf32>
    %c0_67 = arith.constant 0 : index
    %c0_68 = arith.constant 0 : index
    %c0_69 = arith.constant 0 : index
    %152 = vector.load %arg14[%c0_67, %c0_68, %c0_69] : memref<1x8x32xf32, #tpu.memory_space<vmem>>, vector<1x8x32xf32>
    %153 = vector.shape_cast %152 : vector<1x8x32xf32> to vector<8x32xf32>
    %154 = vector.shape_cast %151 : vector<8x32xf32> to vector<1x8x32xf32>
    tpu.vector_store %arg14[%c0_67, %c0_68, %c0_69], %154 {strides = array<i32>} : memref<1x8x32xf32, #tpu.memory_space<vmem>>, vector<1x8x32xf32>,
    return
  }
  func.func @transform_0(%arg0: i32) -> (i32, i32, i32) {
    %c0_i32 = arith.constant 0 : i32
    %c0_i32_0 = arith.constant 0 : i32
    %c0_i32_1 = arith.constant 0 : i32
    return %arg0, %c0_i32, %c0_i32_0 : i32, i32, i32
  }
  func.func @transform_1(%arg0: i32) -> (i32, i32) {
    %c0_i32 = arith.constant 0 : i32
    %c0_i32_0 = arith.constant 0 : i32
    %c0_i32_1 = arith.constant 0 : i32
    return %c0_i32, %c0_i32_0 : i32, i32
  }
  func.func @transform_2(%arg0: i32) -> (i32, i32) {
    %c0_i32 = arith.constant 0 : i32
    %c0_i32_0 = arith.constant 0 : i32
    %c0_i32_1 = arith.constant 0 : i32
    return %c0_i32, %c0_i32_0 : i32, i32
  }
  func.func @transform_3(%arg0: i32) -> (i32, i32, i32) {
    %c0_i32 = arith.constant 0 : i32
    %c0_i32_0 = arith.constant 0 : i32
    %c0_i32_1 = arith.constant 0 : i32
    %c0_i32_2 = arith.constant 0 : i32
    return %c0_i32, %c0_i32_0, %c0_i32_1 : i32, i32, i32
  }
  func.func @transform_4(%arg0: i32) -> (i32, i32) {
    %c0_i32 = arith.constant 0 : i32
    %c0_i32_0 = arith.constant 0 : i32
    %c0_i32_1 = arith.constant 0 : i32
    return %c0_i32, %c0_i32_0 : i32, i32
  }
  func.func @transform_5(%arg0: i32) -> (i32, i32) {
    %c0_i32 = arith.constant 0 : i32
    %c0_i32_0 = arith.constant 0 : i32
    %c0_i32_1 = arith.constant 0 : i32
    return %c0_i32, %c0_i32_0 : i32, i32
  }
  func.func @transform_6(%arg0: i32) -> (i32, i32) {
    %c0_i32 = arith.constant 0 : i32
    %c0_i32_0 = arith.constant 0 : i32
    %c0_i32_1 = arith.constant 0 : i32
    return %c0_i32, %c0_i32_0 : i32, i32
  }
  func.func @transform_7(%arg0: i32) -> (i32, i32) {
    %c0_i32 = arith.constant 0 : i32
    %c0_i32_0 = arith.constant 0 : i32
    %c0_i32_1 = arith.constant 0 : i32
    return %c0_i32, %c0_i32_0 : i32, i32
  }
  func.func @transform_8(%arg0: i32) -> (i32, i32) {
    %c0_i32 = arith.constant 0 : i32
    %c0_i32_0 = arith.constant 0 : i32
    %c0_i32_1 = arith.constant 0 : i32
    return %c0_i32, %c0_i32_0 : i32, i32
  }
  func.func @transform_9(%arg0: i32) -> (i32, i32) {
    %c0_i32 = arith.constant 0 : i32
    %c0_i32_0 = arith.constant 0 : i32
    %c0_i32_1 = arith.constant 0 : i32
    return %c0_i32, %c0_i32_0 : i32, i32
  }
  func.func @transform_10(%arg0: i32) -> (i32, i32) {
    %c0_i32 = arith.constant 0 : i32
    %c0_i32_0 = arith.constant 0 : i32
    %c0_i32_1 = arith.constant 0 : i32
    return %c0_i32, %c0_i32_0 : i32, i32
  }
  func.func @transform_11(%arg0: i32) -> (i32, i32) {
    %c0_i32 = arith.constant 0 : i32
    %c0_i32_0 = arith.constant 0 : i32
    %c0_i32_1 = arith.constant 0 : i32
    return %c0_i32, %c0_i32_0 : i32, i32
  }
  func.func @transform_12(%arg0: i32) -> (i32, i32) {
    %c0_i32 = arith.constant 0 : i32
    %c0_i32_0 = arith.constant 0 : i32
    %c0_i32_1 = arith.constant 0 : i32
    return %c0_i32, %c0_i32_0 : i32, i32
  }
  func.func @transform_13(%arg0: i32) -> (i32, i32, i32) {
    %c0_i32 = arith.constant 0 : i32
    %c0_i32_0 = arith.constant 0 : i32
    %c0_i32_1 = arith.constant 0 : i32
    return %arg0, %c0_i32, %c0_i32_0 : i32, i32, i32
  }
}

</mosaic_0001>

<llo_original>
// kernel: tpu_custom_call.1
$region0: #{tpu_custom_call.1}
  #allocation0 [shape = 'u32[]', space=smem, size = 0x4, offset = 0x4, fixed_abs, tag = 'smem constant byte address 0x4 - core index']
  #allocation1 [shape = 'u32[144,128]{1,0:T(1,128)}', space=vmem, size = 0x12000, scoped, tag = 'internal scratch']
  %s0 = inlined_call_operand.vmem [shape: f32[2,8,32], index: 0, kind: input, shape index: {}]
  %s1 = inlined_call_operand.vmem [shape: f32[32,96], index: 1, kind: input, shape index: {}]
  %s2 = inlined_call_operand.vmem [shape: f32[1,96], index: 2, kind: input, shape index: {}]
  %s3 = inlined_call_operand.vmem [shape: f32[4,8,32], index: 3, kind: input, shape index: {}]
  %s4 = inlined_call_operand.vmem [shape: f32[1,32], index: 4, kind: input, shape index: {}]
  %s5 = inlined_call_operand.vmem [shape: f32[1,32], index: 5, kind: input, shape index: {}]
  %s6 = inlined_call_operand.vmem [shape: f32[1,32], index: 6, kind: input, shape index: {}]
  %s7 = inlined_call_operand.vmem [shape: f32[32,128], index: 7, kind: input, shape index: {}]
  %s8 = inlined_call_operand.vmem [shape: f32[1,128], index: 8, kind: input, shape index: {}]
  %s9 = inlined_call_operand.vmem [shape: f32[128,32], index: 9, kind: input, shape index: {}]
  %s10 = inlined_call_operand.vmem [shape: f32[1,32], index: 10, kind: input, shape index: {}]
  %s11 = inlined_call_operand.vmem [shape: f32[1,32], index: 11, kind: input, shape index: {}]
  %s12 = inlined_call_operand.vmem [shape: f32[1,32], index: 12, kind: input, shape index: {}]
  %s13 = inlined_call_operand.hbm [shape: f32[2,8,32], index: 13, kind: output, shape index: {}]
  %s14 = sld [smem:[#allocation0]]
  $region85: #{tpu_custom_call.1} parent=0
    _
  %s16 = ssub.s32 1, %s14
  %s17 = scalar_select 0, %s16, %s14
  $region1: #{tpu_custom_call.1} parent=0
    #allocation2 [shape = 'u8[8192]{0}', space=vmem, size = 0x2000, scoped, tag = 'output window, operand 0']
    #allocation3 [shape = 's32[2]{0}', space=sflag, size = 0x8, scoped, tag = 'scoped memory for tpu_custom_call.1']
    %18 = vsyncpa [#allocation3], 0
    %s19 = scalar_lea.sflag [#allocation3], 1
    %20 = vsyncpa %s19, 0
    loop: start=0, step=1, limit=4
    $region2: #{tpu_custom_call.1} parent=1 // loop_pre_header
      _
    $region3: #{tpu_custom_call.1} parent=1 // loop_header
      %s22 = sphi 0, %s26
      %p23 = scmp.ge.s32.totalorder %s22, 4
      %s32 = sphi 0, %s34
      %s35 = sphi 0, %s32
      %s36 = sphi 0, %s35
      %s52 = sphi 0, %s36
      %s56 = sphi 0, %s56
      %s58 = sphi 0, %s56
      %s59 = sphi 0, %s58
      %s73 = sphi 0, %s59
      %s77 = sphi 0, %s77
      %s79 = sphi 0, %s77
      %s80 = sphi 0, %s79
      %s94 = sphi 0, %s80
      %s98 = sphi 0, %s98
      %s100 = sphi 0, %s98
      %s101 = sphi 0, %s100
      %s115 = sphi 0, %s101
      %s119 = sphi 0, %s119
      %s121 = sphi 0, %s119
      %s122 = sphi 0, %s121
      %s136 = sphi 0, %s122
      %s140 = sphi 0, %s140
      %s142 = sphi 0, %s140
      %s143 = sphi 0, %s142
      %s157 = sphi 0, %s143
      %s161 = sphi 0, %s161
      %s163 = sphi 0, %s161
      %s164 = sphi 0, %s163
      %s178 = sphi 0, %s164
      %s182 = sphi 0, %s182
      %s184 = sphi 0, %s182
      %s185 = sphi 0, %s184
      %s199 = sphi 0, %s185
      %s203 = sphi 0, %s203
      %s205 = sphi 0, %s203
      %s206 = sphi 0, %s205
      %s220 = sphi 0, %s206
      %s224 = sphi 0, %s224
      %s226 = sphi 0, %s224
      %s227 = sphi 0, %s226
      %s241 = sphi 0, %s227
      %s245 = sphi 0, %s245
      %s247 = sphi 0, %s245
      %s248 = sphi 0, %s247
      %s262 = sphi 0, %s248
      %s266 = sphi 0, %s266
      %s268 = sphi 0, %s266
      %s269 = sphi 0, %s268
      %s283 = sphi 0, %s269
      %s287 = sphi 0, %s287
      %s289 = sphi 0, %s287
      %s290 = sphi 0, %s289
      %s304 = sphi 0, %s290
      %s310 = sphi 0, %s312
      %s313 = sphi 0, %s310
      %s314 = sphi 0, %s313
      %s330 = sphi 0, %s314
    $region4: #{tpu_custom_call.1} parent=1 // loop_header_branch
      %25 = sbr.rel (%p23) target = $region8
    $region5: #{tpu_custom_call.1} parent=1 // loop_body
      %s27 = ssub.s32 %s22, 1
      %s28 = ssub.s32 %s22, 2
      %s29 = sadd.s32 %s22, 1
      %s30 = ssub.s32 %s22, %s29
      %p31 = scmp.eq.s32.totalorder %s30, 0
      %s33 = sadd.s32 %s32, 1
      %s34 = scalar_select %p31, %s32, %s33
      %p37 = pneg %p31
      %p38 = scmp.eq.s32.totalorder %s22, 1
      %p39 = por %p37, %p38
      %p40 = scmp.ne.s32.totalorder %s32, %s35
      %p41 = scmp.eq.s32.totalorder %s22, 0
      %p42 = por %p40, %p41
      %p43 = scmp.ne.s32.totalorder %s32, %s35
      %p44 = scmp.eq.s32.totalorder %s27, 1
      %p45 = por %p43, %p44
      %p46 = scmp.ne.s32.totalorder %s35, %s36
      %p47 = scmp.eq.s32.totalorder %s27, 0
      %p48 = por %p46, %p47
      %p49 = scmp.ne.s32.totalorder %s35, %s36
      %p50 = scmp.eq.s32.totalorder %s28, 1
      %p51 = por %p49, %p50
      %p53 = scmp.ne.s32.totalorder %s36, %s52
      %p54 = scmp.eq.s32.totalorder %s28, 0
      %p55 = por %p53, %p54
      %s57 = sadd.s32 %s56, 1
      %p60 = scmp.eq.s32.totalorder %s22, 1
      %p61 = scmp.ne.s32.totalorder %s56, %s58
      %p62 = scmp.eq.s32.totalorder %s22, 0
      %p63 = por %p61, %p62
      %p64 = scmp.ne.s32.totalorder %s56, %s58
      %p65 = scmp.eq.s32.totalorder %s27, 1
      %p66 = por %p64, %p65
      %p67 = scmp.ne.s32.totalorder %s58, %s59
      %p68 = scmp.eq.s32.totalorder %s27, 0
      %p69 = por %p67, %p68
      %p70 = scmp.ne.s32.totalorder %s58, %s59
      %p71 = scmp.eq.s32.totalorder %s28, 1
      %p72 = por %p70, %p71
      %p74 = scmp.ne.s32.totalorder %s59, %s73
      %p75 = scmp.eq.s32.totalorder %s28, 0
      %p76 = por %p74, %p75
      %s78 = sadd.s32 %s77, 1
      %p81 = scmp.eq.s32.totalorder %s22, 1
      %p82 = scmp.ne.s32.totalorder %s77, %s79
      %p83 = scmp.eq.s32.totalorder %s22, 0
      %p84 = por %p82, %p83
      %p85 = scmp.ne.s32.totalorder %s77, %s79
      %p86 = scmp.eq.s32.totalorder %s27, 1
      %p87 = por %p85, %p86
      %p88 = scmp.ne.s32.totalorder %s79, %s80
      %p89 = scmp.eq.s32.totalorder %s27, 0
      %p90 = por %p88, %p89
      %p91 = scmp.ne.s32.totalorder %s79, %s80
      %p92 = scmp.eq.s32.totalorder %s28, 1
      %p93 = por %p91, %p92
      %p95 = scmp.ne.s32.totalorder %s80, %s94
      %p96 = scmp.eq.s32.totalorder %s28, 0
      %p97 = por %p95, %p96
      %s99 = sadd.s32 %s98, 1
      %p102 = scmp.eq.s32.totalorder %s22, 1
      %p103 = scmp.ne.s32.totalorder %s98, %s100
      %p104 = scmp.eq.s32.totalorder %s22, 0
      %p105 = por %p103, %p104
      %p106 = scmp.ne.s32.totalorder %s98, %s100
      %p107 = scmp.eq.s32.totalorder %s27, 1
      %p108 = por %p106, %p107
      %p109 = scmp.ne.s32.totalorder %s100, %s101
      %p110 = scmp.eq.s32.totalorder %s27, 0
      %p111 = por %p109, %p110
      %p112 = scmp.ne.s32.totalorder %s100, %s101
      %p113 = scmp.eq.s32.totalorder %s28, 1
      %p114 = por %p112, %p113
      %p116 = scmp.ne.s32.totalorder %s101, %s115
      %p117 = scmp.eq.s32.totalorder %s28, 0
      %p118 = por %p116, %p117
      %s120 = sadd.s32 %s119, 1
      %p123 = scmp.eq.s32.totalorder %s22, 1
      %p124 = scmp.ne.s32.totalorder %s119, %s121
      %p125 = scmp.eq.s32.totalorder %s22, 0
      %p126 = por %p124, %p125
      %p127 = scmp.ne.s32.totalorder %s119, %s121
      %p128 = scmp.eq.s32.totalorder %s27, 1
      %p129 = por %p127, %p128
      %p130 = scmp.ne.s32.totalorder %s121, %s122
      %p131 = scmp.eq.s32.totalorder %s27, 0
      %p132 = por %p130, %p131
      %p133 = scmp.ne.s32.totalorder %s121, %s122
      %p134 = scmp.eq.s32.totalorder %s28, 1
      %p135 = por %p133, %p134
      %p137 = scmp.ne.s32.totalorder %s122, %s136
      %p138 = scmp.eq.s32.totalorder %s28, 0
      %p139 = por %p137, %p138
      %s141 = sadd.s32 %s140, 1
      %p144 = scmp.eq.s32.totalorder %s22, 1
      %p145 = scmp.ne.s32.totalorder %s140, %s142
      %p146 = scmp.eq.s32.totalorder %s22, 0
      %p147 = por %p145, %p146
      %p148 = scmp.ne.s32.totalorder %s140, %s142
      %p149 = scmp.eq.s32.totalorder %s27, 1
      %p150 = por %p148, %p149
      %p151 = scmp.ne.s32.totalorder %s142, %s143
      %p152 = scmp.eq.s32.totalorder %s27, 0
      %p153 = por %p151, %p152
      %p154 = scmp.ne.s32.totalorder %s142, %s143
      %p155 = scmp.eq.s32.totalorder %s28, 1
      %p156 = por %p154, %p155
      %p158 = scmp.ne.s32.totalorder %s143, %s157
      %p159 = scmp.eq.s32.totalorder %s28, 0
      %p160 = por %p158, %p159
      %s162 = sadd.s32 %s161, 1
      %p165 = scmp.eq.s32.totalorder %s22, 1
      %p166 = scmp.ne.s32.totalorder %s161, %s163
      %p167 = scmp.eq.s32.totalorder %s22, 0
      %p168 = por %p166, %p167
      %p169 = scmp.ne.s32.totalorder %s161, %s163
      %p170 = scmp.eq.s32.totalorder %s27, 1
      %p171 = por %p169, %p170
      %p172 = scmp.ne.s32.totalorder %s163, %s164
      %p173 = scmp.eq.s32.totalorder %s27, 0
      %p174 = por %p172, %p173
      %p175 = scmp.ne.s32.totalorder %s163, %s164
      %p176 = scmp.eq.s32.totalorder %s28, 1
      %p177 = por %p175, %p176
      %p179 = scmp.ne.s32.totalorder %s164, %s178
      %p180 = scmp.eq.s32.totalorder %s28, 0
      %p181 = por %p179, %p180
      %s183 = sadd.s32 %s182, 1
      %p186 = scmp.eq.s32.totalorder %s22, 1
      %p187 = scmp.ne.s32.totalorder %s182, %s184
      %p188 = scmp.eq.s32.totalorder %s22, 0
      %p189 = por %p187, %p188
      %p190 = scmp.ne.s32.totalorder %s182, %s184
      %p191 = scmp.eq.s32.totalorder %s27, 1
      %p192 = por %p190, %p191
      %p193 = scmp.ne.s32.totalorder %s184, %s185
      %p194 = scmp.eq.s32.totalorder %s27, 0
      %p195 = por %p193, %p194
      %p196 = scmp.ne.s32.totalorder %s184, %s185
      %p197 = scmp.eq.s32.totalorder %s28, 1
      %p198 = por %p196, %p197
      %p200 = scmp.ne.s32.totalorder %s185, %s199
      %p201 = scmp.eq.s32.totalorder %s28, 0
      %p202 = por %p200, %p201
      %s204 = sadd.s32 %s203, 1
      %p207 = scmp.eq.s32.totalorder %s22, 1
      %p208 = scmp.ne.s32.totalorder %s203, %s205
      %p209 = scmp.eq.s32.totalorder %s22, 0
      %p210 = por %p208, %p209
      %p211 = scmp.ne.s32.totalorder %s203, %s205
      %p212 = scmp.eq.s32.totalorder %s27, 1
      %p213 = por %p211, %p212
      %p214 = scmp.ne.s32.totalorder %s205, %s206
      %p215 = scmp.eq.s32.totalorder %s27, 0
      %p216 = por %p214, %p215
      %p217 = scmp.ne.s32.totalorder %s205, %s206
      %p218 = scmp.eq.s32.totalorder %s28, 1
      %p219 = por %p217, %p218
      %p221 = scmp.ne.s32.totalorder %s206, %s220
      %p222 = scmp.eq.s32.totalorder %s28, 0
      %p223 = por %p221, %p222
      %s225 = sadd.s32 %s224, 1
      %p228 = scmp.eq.s32.totalorder %s22, 1
      %p229 = scmp.ne.s32.totalorder %s224, %s226
      %p230 = scmp.eq.s32.totalorder %s22, 0
      %p231 = por %p229, %p230
      %p232 = scmp.ne.s32.totalorder %s224, %s226
      %p233 = scmp.eq.s32.totalorder %s27, 1
      %p234 = por %p232, %p233
      %p235 = scmp.ne.s32.totalorder %s226, %s227
      %p236 = scmp.eq.s32.totalorder %s27, 0
      %p237 = por %p235, %p236
      %p238 = scmp.ne.s32.totalorder %s226, %s227
      %p239 = scmp.eq.s32.totalorder %s28, 1
      %p240 = por %p238, %p239
      %p242 = scmp.ne.s32.totalorder %s227, %s241
      %p243 = scmp.eq.s32.totalorder %s28, 0
      %p244 = por %p242, %p243
      %s246 = sadd.s32 %s245, 1
      %p249 = scmp.eq.s32.totalorder %s22, 1
      %p250 = scmp.ne.s32.totalorder %s245, %s247
      %p251 = scmp.eq.s32.totalorder %s22, 0
      %p252 = por %p250, %p251
      %p253 = scmp.ne.s32.totalorder %s245, %s247
      %p254 = scmp.eq.s32.totalorder %s27, 1
      %p255 = por %p253, %p254
      %p256 = scmp.ne.s32.totalorder %s247, %s248
      %p257 = scmp.eq.s32.totalorder %s27, 0
      %p258 = por %p256, %p257
      %p259 = scmp.ne.s32.totalorder %s247, %s248
      %p260 = scmp.eq.s32.totalorder %s28, 1
      %p261 = por %p259, %p260
      %p263 = scmp.ne.s32.totalorder %s248, %s262
      %p264 = scmp.eq.s32.totalorder %s28, 0
      %p265 = por %p263, %p264
      %s267 = sadd.s32 %s266, 1
      %p270 = scmp.eq.s32.totalorder %s22, 1
      %p271 = scmp.ne.s32.totalorder %s266, %s268
      %p272 = scmp.eq.s32.totalorder %s22, 0
      %p273 = por %p271, %p272
      %p274 = scmp.ne.s32.totalorder %s266, %s268
      %p275 = scmp.eq.s32.totalorder %s27, 1
      %p276 = por %p274, %p275
      %p277 = scmp.ne.s32.totalorder %s268, %s269
      %p278 = scmp.eq.s32.totalorder %s27, 0
      %p279 = por %p277, %p278
      %p280 = scmp.ne.s32.totalorder %s268, %s269
      %p281 = scmp.eq.s32.totalorder %s28, 1
      %p282 = por %p280, %p281
      %p284 = scmp.ne.s32.totalorder %s269, %s283
      %p285 = scmp.eq.s32.totalorder %s28, 0
      %p286 = por %p284, %p285
      %s288 = sadd.s32 %s287, 1
      %p291 = scmp.eq.s32.totalorder %s22, 1
      %p292 = scmp.ne.s32.totalorder %s287, %s289
      %p293 = scmp.eq.s32.totalorder %s22, 0
      %p294 = por %p292, %p293
      %p295 = scmp.ne.s32.totalorder %s287, %s289
      %p296 = scmp.eq.s32.totalorder %s27, 1
      %p297 = por %p295, %p296
      %p298 = scmp.ne.s32.totalorder %s289, %s290
      %p299 = scmp.eq.s32.totalorder %s27, 0
      %p300 = por %p298, %p299
      %p301 = scmp.ne.s32.totalorder %s289, %s290
      %p302 = scmp.eq.s32.totalorder %s28, 1
      %p303 = por %p301, %p302
      %p305 = scmp.ne.s32.totalorder %s290, %s304
      %p306 = scmp.eq.s32.totalorder %s28, 0
      %p307 = por %p305, %p306
      %s308 = ssub.s32 %s22, %s29
      %p309 = scmp.eq.s32.totalorder %s308, 0
      %s311 = sadd.s32 %s310, 1
      %s312 = scalar_select %p309, %s310, %s311
      %p315 = pneg %p309
      %p316 = scmp.eq.s32.totalorder %s22, 1
      %p317 = por %p315, %p316
      %p318 = scmp.ne.s32.totalorder %s310, %s313
      %p319 = scmp.eq.s32.totalorder %s22, 0
      %p320 = por %p318, %p319
      %p321 = scmp.ne.s32.totalorder %s310, %s313
      %p322 = scmp.eq.s32.totalorder %s27, 1
      %p323 = por %p321, %p322
      %p324 = scmp.ne.s32.totalorder %s313, %s314
      %p325 = scmp.eq.s32.totalorder %s27, 0
      %p326 = por %p324, %p325
      %p327 = scmp.ne.s32.totalorder %s313, %s314
      %p328 = scmp.eq.s32.totalorder %s28, 1
      %p329 = por %p327, %p328
      %p331 = scmp.ne.s32.totalorder %s314, %s330
      %p332 = scmp.eq.s32.totalorder %s28, 0
      %p333 = por %p331, %p332
      %p334 = scmp.le.s32.totalorder 1, %s22
      %p335 = scmp.lt.s32.totalorder %s22, 3
      %p336 = pnand %p334, %p335
      %p337 = pneg %p336
      // Predicated region
      $region9: #{tpu_custom_call.1} parent=5 // pred_check
        _
      $region10: #{tpu_custom_call.1} parent=5 // pred_check_branch
        %339 = sbr.rel (%p336) target = $region12
      $region11: #{tpu_custom_call.1} parent=5 // pred_region
        %s340 = ssub.s32 %s22, 1
        // Predicated region
        $region13: #{tpu_custom_call.1} parent=11 // pred_check
          %p341 = pneg %p69
        $region14: #{tpu_custom_call.1} parent=11 // pred_check_branch
          %343 = sbr.rel (%p341) target = $region16
        $region15: #{tpu_custom_call.1} parent=11 // pred_region
          _
        $region16: #{tpu_custom_call.1} parent=11 // pred_fallthru
          _
        // Predicated region
        $region17: #{tpu_custom_call.1} parent=11 // pred_check
          %p344 = pneg %p90
        $region18: #{tpu_custom_call.1} parent=11 // pred_check_branch
          %346 = sbr.rel (%p344) target = $region20
        $region19: #{tpu_custom_call.1} parent=11 // pred_region
          _
        $region20: #{tpu_custom_call.1} parent=11 // pred_fallthru
          _
        // Predicated region
        $region21: #{tpu_custom_call.1} parent=11 // pred_check
          %p347 = pneg %p111
        $region22: #{tpu_custom_call.1} parent=11 // pred_check_branch
          %349 = sbr.rel (%p347) target = $region24
        $region23: #{tpu_custom_call.1} parent=11 // pred_region
          _
        $region24: #{tpu_custom_call.1} parent=11 // pred_fallthru
          _
        // Predicated region
        $region25: #{tpu_custom_call.1} parent=11 // pred_check
          %p350 = pneg %p132
        $region26: #{tpu_custom_call.1} parent=11 // pred_check_branch
          %352 = sbr.rel (%p350) target = $region28
        $region27: #{tpu_custom_call.1} parent=11 // pred_region
          _
        $region28: #{tpu_custom_call.1} parent=11 // pred_fallthru
          _
        // Predicated region
        $region29: #{tpu_custom_call.1} parent=11 // pred_check
          %p353 = pneg %p153
        $region30: #{tpu_custom_call.1} parent=11 // pred_check_branch
          %355 = sbr.rel (%p353) target = $region32
        $region31: #{tpu_custom_call.1} parent=11 // pred_region
          _
        $region32: #{tpu_custom_call.1} parent=11 // pred_fallthru
          _
        // Predicated region
        $region33: #{tpu_custom_call.1} parent=11 // pred_check
          %p356 = pneg %p174
        $region34: #{tpu_custom_call.1} parent=11 // pred_check_branch
          %358 = sbr.rel (%p356) target = $region36
        $region35: #{tpu_custom_call.1} parent=11 // pred_region
          _
        $region36: #{tpu_custom_call.1} parent=11 // pred_fallthru
          _
        // Predicated region
        $region37: #{tpu_custom_call.1} parent=11 // pred_check
          %p359 = pneg %p195
        $region38: #{tpu_custom_call.1} parent=11 // pred_check_branch
          %361 = sbr.rel (%p359) target = $region40
        $region39: #{tpu_custom_call.1} parent=11 // pred_region
          _
        $region40: #{tpu_custom_call.1} parent=11 // pred_fallthru
          _
        // Predicated region
        $region41: #{tpu_custom_call.1} parent=11 // pred_check
          %p362 = pneg %p216
        $region42: #{tpu_custom_call.1} parent=11 // pred_check_branch
          %364 = sbr.rel (%p362) target = $region44
        $region43: #{tpu_custom_call.1} parent=11 // pred_region
          _
        $region44: #{tpu_custom_call.1} parent=11 // pred_fallthru
          _
        // Predicated region
        $region45: #{tpu_custom_call.1} parent=11 // pred_check
          %p365 = pneg %p237
        $region46: #{tpu_custom_call.1} parent=11 // pred_check_branch
          %367 = sbr.rel (%p365) target = $region48
        $region47: #{tpu_custom_call.1} parent=11 // pred_region
          _
        $region48: #{tpu_custom_call.1} parent=11 // pred_fallthru
          _
        // Predicated region
        $region49: #{tpu_custom_call.1} parent=11 // pred_check
          %p368 = pneg %p258
        $region50: #{tpu_custom_call.1} parent=11 // pred_check_branch
          %370 = sbr.rel (%p368) target = $region52
        $region51: #{tpu_custom_call.1} parent=11 // pred_region
          _
        $region52: #{tpu_custom_call.1} parent=11 // pred_fallthru
          _
        // Predicated region
        $region53: #{tpu_custom_call.1} parent=11 // pred_check
          %p371 = pneg %p279
        $region54: #{tpu_custom_call.1} parent=11 // pred_check_branch
          %373 = sbr.rel (%p371) target = $region56
        $region55: #{tpu_custom_call.1} parent=11 // pred_region
          _
        $region56: #{tpu_custom_call.1} parent=11 // pred_fallthru
          _
        // Predicated region
        $region57: #{tpu_custom_call.1} parent=11 // pred_check
          %p374 = pneg %p300
        $region58: #{tpu_custom_call.1} parent=11 // pred_check_branch
          %376 = sbr.rel (%p374) target = $region60
        $region59: #{tpu_custom_call.1} parent=11 // pred_region
          _
        $region60: #{tpu_custom_call.1} parent=11 // pred_fallthru
          _
      $region12: #{tpu_custom_call.1} parent=5 // pred_fallthru
        _
      %p377 = scmp.lt.s32.totalorder %s22, 2
      // Predicated region
      $region61: #{tpu_custom_call.1} parent=5 // pred_check
        %p378 = pneg %p377
      $region62: #{tpu_custom_call.1} parent=5 // pred_check_branch
        %380 = sbr.rel (%p378) target = $region64
      $region63: #{tpu_custom_call.1} parent=5 // pred_region
        // Predicated region
        $region65: #{tpu_custom_call.1} parent=63 // pred_check
          %p381 = pneg %p42
        $region66: #{tpu_custom_call.1} parent=63 // pred_check_branch
          %383 = sbr.rel (%p381) target = $region68
        $region67: #{tpu_custom_call.1} parent=63 // pred_region
          %p384 = scmp.lt.s32.totalorder %s22, 1
          %s385 = scalar_select %p384, %s22, 1
          %s386 = smul.addr %s385, 8
          %s387 = scalar_lea.vmem %s0, %s386
        $region68: #{tpu_custom_call.1} parent=63 // pred_fallthru
          _
      $region64: #{tpu_custom_call.1} parent=5 // pred_fallthru
        _
      %p388 = scmp.le.s32.totalorder 1, %s22
      %p389 = scmp.lt.s32.totalorder %s22, 3
      %p390 = pnand %p388, %p389
      %p391 = pneg %p390
      // Predicated region
      $region69: #{tpu_custom_call.1} parent=5 // pred_check
        _
      $region70: #{tpu_custom_call.1} parent=5 // pred_check_branch
        %393 = sbr.rel (%p390) target = $region72
      $region71: #{tpu_custom_call.1} parent=5 // pred_region
        %s394 = ssub.s32 %s22, 1
        %p395 = scmp.lt.s32.totalorder %s27, 1
        %s396 = scalar_select %p395, %s27, 1
        %s397 = smul.addr %s396, 8
        %s398 = scalar_lea.vmem %s0, %s397
        %p399 = pneg %p48
        %p400 = pneg %p45
        %p401 = pneg %p69
        %p402 = pneg %p66
        %p403 = pneg %p90
        %p404 = pneg %p87
        %p405 = pneg %p111
        %p406 = pneg %p108
        %p407 = pneg %p132
        %p408 = pneg %p129
        %p409 = pneg %p153
        %p410 = pneg %p150
        %p411 = pneg %p174
        %p412 = pneg %p171
        %p413 = pneg %p195
        %p414 = pneg %p192
        %p415 = pneg %p216
        %p416 = pneg %p213
        %p417 = pneg %p237
        %p418 = pneg %p234
        %p419 = pneg %p258
        %p420 = pneg %p255
        %p421 = pneg %p279
        %p422 = pneg %p276
        %p423 = pneg %p300
        %p424 = pneg %p297
        %p425 = pneg %p326
        %p426 = pneg %p323
        %s427 = sand.u32 %s313, 1
        %s428 = scalar_lea.sflag [#allocation3], %s427
        %s429 = sand.u32 %s313, 1
        %s430 = smul.addr %s429, 8
        %s431 = scalar_lea.vmem [#allocation2], %s430
        %p432 = scmp.lt.s32.totalorder %s27, 1
        %s433 = scalar_select %p432, %s27, 1
        %s434 = smul.addr %s433, 8
        %s435 = scalar_lea.vmem %s0, %s434
        %v436 = vld [vmem:[%s435] sm:$0xff]
        %v437 = vld [vmem:[%s1] sm:$0xff]
        %v438 = vld [vmem:[%s1 + $0x8] sm:$0xff]
        %v439 = vld [vmem:[%s1 + $0x10] sm:$0xff]
        %v440 = vld [vmem:[%s1 + $0x18] sm:$0xff]
        %v441 = vld [vmem:[%s2] sm:$0x1]
        %v443 = vlaneseq
        %v444 = vshrl.u32 %v443, 7
        %v445 = vsub.s32 0, %v444
        %v446 = vrot.slane %v441, %v445
        %vm448 = vcmask 261120
        %v450 = vsel %vm448, %v436, 0
        %452 = vmatprep.subr.mxu0 0.0
        %453 = vmatpush1.msra.mxu0 %v437
        %454 = vmatprep.subr.mxu0 0.0
        %455 = vmatpush1.msra.mxu0 %v438
        %456 = vmatprep.subr.mxu0 0.0
        %457 = vmatpush1.msra.mxu0 %v439
        %458 = vmatprep.subr.mxu0 0.0
        %459 = vmatpush1.msra.mxu0 %v440
        %460 = vmatprep.subr.mxu0 0.0
        %461 = vmatpush1.msra.mxu0 0.0
        %462 = vmatprep.subr.mxu0 0.0
        %463 = vmatpush1.msra.mxu0 0.0
        %464 = vmatprep.subr.mxu0 0.0
        %465 = vmatpush1.msra.mxu0 0.0
        %466 = vmatprep.subr.mxu0 0.0
        %467 = vmatpush1.msra.mxu0 0.0
        %468 = vmatprep.subr.mxu0 0.0
        %469 = vmatpush1.msra.mxu0 0.0
        %470 = vmatprep.subr.mxu0 0.0
        %471 = vmatpush1.msra.mxu0 0.0
        %472 = vmatprep.subr.mxu0 0.0
        %473 = vmatpush1.msra.mxu0 0.0
        %474 = vmatprep.subr.mxu0 0.0
        %475 = vmatpush1.msra.mxu0 0.0
        %476 = vmatprep.subr.mxu0 0.0
        %477 = vmatpush1.msra.mxu0 0.0
        %478 = vmatprep.subr.mxu0 0.0
        %479 = vmatpush1.msra.mxu0 0.0
        %480 = vmatprep.subr.mxu0 0.0
        %481 = vmatpush1.msra.mxu0 0.0
        %482 = vmatprep.subr.mxu0 0.0
        %483 = vmatpush1.msra.mxu0 0.0
        %484 = vmatprep.subr.mxu0 0.0
        %485 = vmatpush1.msra.mxu0 0.0
        %486 = vmatprep.subr.mxu0 0.0
        %487 = vmatpush1.msra.mxu0 0.0
        %488 = vmatprep.subr.mxu0 0.0
        %489 = vmatpush1.msra.mxu0 0.0
        %490 = vmatprep.subr.mxu0 0.0
        %491 = vmatpush1.msra.mxu0 0.0
        %492 = vmatprep.subr.mxu0 0.0
        %493 = vmatpush1.msra.mxu0 0.0
        %494 = vmatprep.subr.mxu0 0.0
        %495 = vmatpush1.msra.mxu0 0.0
        %496 = vmatprep.subr.mxu0 0.0
        %497 = vmatpush1.msra.mxu0 0.0
        %498 = vmatprep.subr.mxu0 0.0
        %499 = vmatpush1.msra.mxu0 0.0
        %500 = vmatprep.subr.mxu0 0.0
        %501 = vmatpush1.msra.mxu0 0.0
        %502 = vmatprep.subr.mxu0 0.0
        %503 = vmatpush1.msra.mxu0 0.0
        %504 = vmatprep.subr.mxu0 0.0
        %505 = vmatpush1.msra.mxu0 0.0
        %506 = vmatprep.subr.mxu0 0.0
        %507 = vmatpush1.msra.mxu0 0.0
        %508 = vmatprep.subr.mxu0 0.0
        %509 = vmatpush1.msra.mxu0 0.0
        %510 = vmatprep.subr.mxu0 0.0
        %511 = vmatpush1.msra.mxu0 0.0
        %512 = vmatprep.subr.mxu0 0.0
        %513 = vmatpush1.msra.mxu0 0.0
        %514 = vmatprep.subr.mxu0 0.0
        %515 = vmatpush1.msra.mxu0 0.0
        %516 = vmatprep.mubr.f32.mxu0 0.0
        %517 = vmatmul.mubr.f32.gmra.mrb[0].mxu0 %v450
        %v518 = vpop.f32.mrb[0].mxu0
        %v519 = vadd.f32 %v446, %v518
        %v520 = vpop.f32.mrb[0].mxu0
        %521 = vdwg.mxu0
        %523 = vrot.lane.b32.xlu0 %v519, 96
        %v524 = vpop.permute.xlu0 %523
        %vm525 = vcmask 64512
        %v526 = vsel %vm525, %v519, 0
        %v528 = vsel %vm525, %v524, 0
        %530 = vmatprep.subr.mxu0 0.0
        %531 = vmatpush1.xpose.msra.mxu0 %v528
        %532 = vmatprep.subr.mxu0 0.0
        %533 = vmatpush1.xpose.msra.mxu0 0.0
        %534 = vmatprep.subr.mxu0 0.0
        %535 = vmatpush1.xpose.msra.mxu0 0.0
        %536 = vmatprep.subr.mxu0 0.0
        %537 = vmatpush1.xpose.msra.mxu0 0.0
        %538 = vmatprep.subr.mxu0 0.0
        %539 = vmatpush1.xpose.msra.mxu0 0.0
        %540 = vmatprep.subr.mxu0 0.0
        %541 = vmatpush1.xpose.msra.mxu0 0.0
        %542 = vmatprep.subr.mxu0 0.0
        %543 = vmatpush1.xpose.msra.mxu0 0.0
        %544 = vmatprep.subr.mxu0 0.0
        %545 = vmatpush1.xpose.msra.mxu0 0.0
        %546 = vmatprep.subr.mxu0 0.0
        %547 = vmatpush1.xpose.msra.mxu0 0.0
        %548 = vmatprep.subr.mxu0 0.0
        %549 = vmatpush1.xpose.msra.mxu0 0.0
        %550 = vmatprep.subr.mxu0 0.0
        %551 = vmatpush1.xpose.msra.mxu0 0.0
        %552 = vmatprep.subr.mxu0 0.0
        %553 = vmatpush1.xpose.msra.mxu0 0.0
        %554 = vmatprep.subr.mxu0 0.0
        %555 = vmatpush1.xpose.msra.mxu0 0.0
        %556 = vmatprep.subr.mxu0 0.0
        %557 = vmatpush1.xpose.msra.mxu0 0.0
        %558 = vmatprep.subr.mxu0 0.0
        %559 = vmatpush1.xpose.msra.mxu0 0.0
        %560 = vmatprep.subr.mxu0 0.0
        %561 = vmatpush1.xpose.msra.mxu0 0.0
        %562 = vmatprep.subr.mxu0 0.0
        %563 = vmatpush1.xpose.msra.mxu0 0.0
        %564 = vmatprep.subr.mxu0 0.0
        %565 = vmatpush1.xpose.msra.mxu0 0.0
        %566 = vmatprep.subr.mxu0 0.0
        %567 = vmatpush1.xpose.msra.mxu0 0.0
        %568 = vmatprep.subr.mxu0 0.0
        %569 = vmatpush1.xpose.msra.mxu0 0.0
        %570 = vmatprep.subr.mxu0 0.0
        %571 = vmatpush1.xpose.msra.mxu0 0.0
        %572 = vmatprep.subr.mxu0 0.0
        %573 = vmatpush1.xpose.msra.mxu0 0.0
        %574 = vmatprep.subr.mxu0 0.0
        %575 = vmatpush1.xpose.msra.mxu0 0.0
        %576 = vmatprep.subr.mxu0 0.0
        %577 = vmatpush1.xpose.msra.mxu0 0.0
        %578 = vmatprep.subr.mxu0 0.0
        %579 = vmatpush1.xpose.msra.mxu0 0.0
        %580 = vmatprep.subr.mxu0 0.0
        %581 = vmatpush1.xpose.msra.mxu0 0.0
        %582 = vmatprep.subr.mxu0 0.0
        %583 = vmatpush1.xpose.msra.mxu0 0.0
        %584 = vmatprep.subr.mxu0 0.0
        %585 = vmatpush1.xpose.msra.mxu0 0.0
        %586 = vmatprep.subr.mxu0 0.0
        %587 = vmatpush1.xpose.msra.mxu0 0.0
        %588 = vmatprep.subr.mxu0 0.0
        %589 = vmatpush1.xpose.msra.mxu0 0.0
        %590 = vmatprep.subr.mxu0 0.0
        %591 = vmatpush1.xpose.msra.mxu0 0.0
        %592 = vmatprep.subr.mxu0 0.0
        %593 = vmatpush1.xpose.msra.mxu0 0.0
        %594 = vmatprep.mubr.f32.mxu0 0.0
        %595 = vmatmul.mubr.f32.gmra.mrb[0].mxu0 %v526
        %v596 = vpop.f32.mrb[0].mxu0
        %v597 = vadd.f32 0.0, %v596
        %v598 = vpop.f32.mrb[0].mxu0
        %599 = vdwg.mxu0
        %v600 = vsel %vm525, %v597, -inf
        %601 = vmax.xlane.f32.xlu0 %v600
        %v602 = vpop.xlane.xlu0 %601
        %v603 = vsub.f32 %v597, %v602
        %v604 = vmul.f32 %v603, 1.442695
        %v605 = vpow.pop %v604
        %v606 = vsel %vm525, %v605, 0.0
        %607 = vadd.xlane.f32.xlu0 %v606
        %v608 = vpop.xlane.xlu0 %607
        %v609 = vrcp.pop %v608
        %v610 = vmul.f32 %v605, %v609
        %611 = vrot.lane.b32.xlu0 %v519, 64
        %v612 = vpop.permute.xlu0 %611
        %v615 = vsel %vm525, %v610, 0
        %617 = vmatprep.subr.mxu0 0.0
        %618 = vmatpush1.msra.mxu0 %v612
        %619 = vmatprep.subr.mxu0 0.0
        %620 = vmatpush1.msra.mxu0 0.0
        %621 = vmatprep.subr.mxu0 0.0
        %622 = vmatpush1.msra.mxu0 0.0
        %623 = vmatprep.subr.mxu0 0.0
        %624 = vmatpush1.msra.mxu0 0.0
        %625 = vmatprep.subr.mxu0 0.0
        %626 = vmatpush1.msra.mxu0 0.0
        %627 = vmatprep.subr.mxu0 0.0
        %628 = vmatpush1.msra.mxu0 0.0
        %629 = vmatprep.subr.mxu0 0.0
        %630 = vmatpush1.msra.mxu0 0.0
        %631 = vmatprep.subr.mxu0 0.0
        %632 = vmatpush1.msra.mxu0 0.0
        %633 = vmatprep.subr.mxu0 0.0
        %634 = vmatpush1.msra.mxu0 0.0
        %635 = vmatprep.subr.mxu0 0.0
        %636 = vmatpush1.msra.mxu0 0.0
        %637 = vmatprep.subr.mxu0 0.0
        %638 = vmatpush1.msra.mxu0 0.0
        %639 = vmatprep.subr.mxu0 0.0
        %640 = vmatpush1.msra.mxu0 0.0
        %641 = vmatprep.subr.mxu0 0.0
        %642 = vmatpush1.msra.mxu0 0.0
        %643 = vmatprep.subr.mxu0 0.0
        %644 = vmatpush1.msra.mxu0 0.0
        %645 = vmatprep.subr.mxu0 0.0
        %646 = vmatpush1.msra.mxu0 0.0
        %647 = vmatprep.subr.mxu0 0.0
        %648 = vmatpush1.msra.mxu0 0.0
        %649 = vmatprep.subr.mxu0 0.0
        %650 = vmatpush1.msra.mxu0 0.0
        %651 = vmatprep.subr.mxu0 0.0
        %652 = vmatpush1.msra.mxu0 0.0
        %653 = vmatprep.subr.mxu0 0.0
        %654 = vmatpush1.msra.mxu0 0.0
        %655 = vmatprep.subr.mxu0 0.0
        %656 = vmatpush1.msra.mxu0 0.0
        %657 = vmatprep.subr.mxu0 0.0
        %658 = vmatpush1.msra.mxu0 0.0
        %659 = vmatprep.subr.mxu0 0.0
        %660 = vmatpush1.msra.mxu0 0.0
        %661 = vmatprep.subr.mxu0 0.0
        %662 = vmatpush1.msra.mxu0 0.0
        %663 = vmatprep.subr.mxu0 0.0
        %664 = vmatpush1.msra.mxu0 0.0
        %665 = vmatprep.subr.mxu0 0.0
        %666 = vmatpush1.msra.mxu0 0.0
        %667 = vmatprep.subr.mxu0 0.0
        %668 = vmatpush1.msra.mxu0 0.0
        %669 = vmatprep.subr.mxu0 0.0
        %670 = vmatpush1.msra.mxu0 0.0
        %671 = vmatprep.subr.mxu0 0.0
        %672 = vmatpush1.msra.mxu0 0.0
        %673 = vmatprep.subr.mxu0 0.0
        %674 = vmatpush1.msra.mxu0 0.0
        %675 = vmatprep.subr.mxu0 0.0
        %676 = vmatpush1.msra.mxu0 0.0
        %677 = vmatprep.subr.mxu0 0.0
        %678 = vmatpush1.msra.mxu0 0.0
        %679 = vmatprep.subr.mxu0 0.0
        %680 = vmatpush1.msra.mxu0 0.0
        %681 = vmatprep.mubr.f32.mxu0 0.0
        %682 = vmatmul.mubr.f32.gmra.mrb[0].mxu0 %v615
        %v683 = vpop.f32.mrb[0].mxu0
        %v684 = vadd.f32 0.0, %v683
        %v685 = vpop.f32.mrb[0].mxu0
        %686 = vdwg.mxu0
        %v687 = vld [vmem:[%s3] sm:$0xff]
        %688 = vrot.lane.b32.xlu0 %v519, 120
        %v689 = vpop.permute.xlu0 %688
        %690 = vrot.lane.b32.xlu0 %v519, 88
        %v691 = vpop.permute.xlu0 %690
        %v692 = vsel %vm525, %v689, 0
        %v694 = vsel %vm525, %v691, 0
        %696 = vmatprep.subr.mxu0 0.0
        %697 = vmatpush1.xpose.msra.mxu0 %v694
        %698 = vmatprep.subr.mxu0 0.0
        %699 = vmatpush1.xpose.msra.mxu0 0.0
        %700 = vmatprep.subr.mxu0 0.0
        %701 = vmatpush1.xpose.msra.mxu0 0.0
        %702 = vmatprep.subr.mxu0 0.0
        %703 = vmatpush1.xpose.msra.mxu0 0.0
        %704 = vmatprep.subr.mxu0 0.0
        %705 = vmatpush1.xpose.msra.mxu0 0.0
        %706 = vmatprep.subr.mxu0 0.0
        %707 = vmatpush1.xpose.msra.mxu0 0.0
        %708 = vmatprep.subr.mxu0 0.0
        %709 = vmatpush1.xpose.msra.mxu0 0.0
        %710 = vmatprep.subr.mxu0 0.0
        %711 = vmatpush1.xpose.msra.mxu0 0.0
        %712 = vmatprep.subr.mxu0 0.0
        %713 = vmatpush1.xpose.msra.mxu0 0.0
        %714 = vmatprep.subr.mxu0 0.0
        %715 = vmatpush1.xpose.msra.mxu0 0.0
        %716 = vmatprep.subr.mxu0 0.0
        %717 = vmatpush1.xpose.msra.mxu0 0.0
        %718 = vmatprep.subr.mxu0 0.0
        %719 = vmatpush1.xpose.msra.mxu0 0.0
        %720 = vmatprep.subr.mxu0 0.0
        %721 = vmatpush1.xpose.msra.mxu0 0.0
        %722 = vmatprep.subr.mxu0 0.0
        %723 = vmatpush1.xpose.msra.mxu0 0.0
        %724 = vmatprep.subr.mxu0 0.0
        %725 = vmatpush1.xpose.msra.mxu0 0.0
        %726 = vmatprep.subr.mxu0 0.0
        %727 = vmatpush1.xpose.msra.mxu0 0.0
        %728 = vmatprep.subr.mxu0 0.0
        %729 = vmatpush1.xpose.msra.mxu0 0.0
        %730 = vmatprep.subr.mxu0 0.0
        %731 = vmatpush1.xpose.msra.mxu0 0.0
        %732 = vmatprep.subr.mxu0 0.0
        %733 = vmatpush1.xpose.msra.mxu0 0.0
        %734 = vmatprep.subr.mxu0 0.0
        %735 = vmatpush1.xpose.msra.mxu0 0.0
        %736 = vmatprep.subr.mxu0 0.0
        %737 = vmatpush1.xpose.msra.mxu0 0.0
        %738 = vmatprep.subr.mxu0 0.0
        %739 = vmatpush1.xpose.msra.mxu0 0.0
        %740 = vmatprep.subr.mxu0 0.0
        %741 = vmatpush1.xpose.msra.mxu0 0.0
        %742 = vmatprep.subr.mxu0 0.0
        %743 = vmatpush1.xpose.msra.mxu0 0.0
        %744 = vmatprep.subr.mxu0 0.0
        %745 = vmatpush1.xpose.msra.mxu0 0.0
        %746 = vmatprep.subr.mxu0 0.0
        %747 = vmatpush1.xpose.msra.mxu0 0.0
        %748 = vmatprep.subr.mxu0 0.0
        %749 = vmatpush1.xpose.msra.mxu0 0.0
        %750 = vmatprep.subr.mxu0 0.0
        %751 = vmatpush1.xpose.msra.mxu0 0.0
        %752 = vmatprep.subr.mxu0 0.0
        %753 = vmatpush1.xpose.msra.mxu0 0.0
        %754 = vmatprep.subr.mxu0 0.0
        %755 = vmatpush1.xpose.msra.mxu0 0.0
        %756 = vmatprep.subr.mxu0 0.0
        %757 = vmatpush1.xpose.msra.mxu0 0.0
        %758 = vmatprep.subr.mxu0 0.0
        %759 = vmatpush1.xpose.msra.mxu0 0.0
        %760 = vmatprep.mubr.f32.mxu0 0.0
        %761 = vmatmul.mubr.f32.gmra.mrb[0].mxu0 %v692
        %v762 = vpop.f32.mrb[0].mxu0
        %v763 = vadd.f32 0.0, %v762
        %v764 = vpop.f32.mrb[0].mxu0
        %765 = vdwg.mxu0
        %v766 = vsel %vm525, %v763, -inf
        %767 = vmax.xlane.f32.xlu0 %v766
        %v768 = vpop.xlane.xlu0 %767
        %v769 = vsub.f32 %v763, %v768
        %v770 = vmul.f32 %v769, 1.442695
        %v771 = vpow.pop %v770
        %v772 = vsel %vm525, %v771, 0.0
        %773 = vadd.xlane.f32.xlu0 %v772
        %v774 = vpop.xlane.xlu0 %773
        %v775 = vrcp.pop %v774
        %v776 = vmul.f32 %v771, %v775
        %777 = vrot.lane.b32.xlu0 %v519, 56
        %v778 = vpop.permute.xlu0 %777
        %v781 = vsel %vm525, %v776, 0
        %783 = vmatprep.subr.mxu0 0.0
        %784 = vmatpush1.msra.mxu0 %v778
        %785 = vmatprep.subr.mxu0 0.0
        %786 = vmatpush1.msra.mxu0 0.0
        %787 = vmatprep.subr.mxu0 0.0
        %788 = vmatpush1.msra.mxu0 0.0
        %789 = vmatprep.subr.mxu0 0.0
        %790 = vmatpush1.msra.mxu0 0.0
        %791 = vmatprep.subr.mxu0 0.0
        %792 = vmatpush1.msra.mxu0 0.0
        %793 = vmatprep.subr.mxu0 0.0
        %794 = vmatpush1.msra.mxu0 0.0
        %795 = vmatprep.subr.mxu0 0.0
        %796 = vmatpush1.msra.mxu0 0.0
        %797 = vmatprep.subr.mxu0 0.0
        %798 = vmatpush1.msra.mxu0 0.0
        %799 = vmatprep.subr.mxu0 0.0
        %800 = vmatpush1.msra.mxu0 0.0
        %801 = vmatprep.subr.mxu0 0.0
        %802 = vmatpush1.msra.mxu0 0.0
        %803 = vmatprep.subr.mxu0 0.0
        %804 = vmatpush1.msra.mxu0 0.0
        %805 = vmatprep.subr.mxu0 0.0
        %806 = vmatpush1.msra.mxu0 0.0
        %807 = vmatprep.subr.mxu0 0.0
        %808 = vmatpush1.msra.mxu0 0.0
        %809 = vmatprep.subr.mxu0 0.0
        %810 = vmatpush1.msra.mxu0 0.0
        %811 = vmatprep.subr.mxu0 0.0
        %812 = vmatpush1.msra.mxu0 0.0
        %813 = vmatprep.subr.mxu0 0.0
        %814 = vmatpush1.msra.mxu0 0.0
        %815 = vmatprep.subr.mxu0 0.0
        %816 = vmatpush1.msra.mxu0 0.0
        %817 = vmatprep.subr.mxu0 0.0
        %818 = vmatpush1.msra.mxu0 0.0
        %819 = vmatprep.subr.mxu0 0.0
        %820 = vmatpush1.msra.mxu0 0.0
        %821 = vmatprep.subr.mxu0 0.0
        %822 = vmatpush1.msra.mxu0 0.0
        %823 = vmatprep.subr.mxu0 0.0
        %824 = vmatpush1.msra.mxu0 0.0
        %825 = vmatprep.subr.mxu0 0.0
        %826 = vmatpush1.msra.mxu0 0.0
        %827 = vmatprep.subr.mxu0 0.0
        %828 = vmatpush1.msra.mxu0 0.0
        %829 = vmatprep.subr.mxu0 0.0
        %830 = vmatpush1.msra.mxu0 0.0
        %831 = vmatprep.subr.mxu0 0.0
        %832 = vmatpush1.msra.mxu0 0.0
        %833 = vmatprep.subr.mxu0 0.0
        %834 = vmatpush1.msra.mxu0 0.0
        %835 = vmatprep.subr.mxu0 0.0
        %836 = vmatpush1.msra.mxu0 0.0
        %837 = vmatprep.subr.mxu0 0.0
        %838 = vmatpush1.msra.mxu0 0.0
        %839 = vmatprep.subr.mxu0 0.0
        %840 = vmatpush1.msra.mxu0 0.0
        %841 = vmatprep.subr.mxu0 0.0
        %842 = vmatpush1.msra.mxu0 0.0
        %843 = vmatprep.subr.mxu0 0.0
        %844 = vmatpush1.msra.mxu0 0.0
        %845 = vmatprep.subr.mxu0 0.0
        %846 = vmatpush1.msra.mxu0 0.0
        %847 = vmatprep.mubr.f32.mxu0 0.0
        %848 = vmatmul.mubr.f32.gmra.mrb[0].mxu0 %v781
        %v849 = vpop.f32.mrb[0].mxu0
        %v850 = vadd.f32 0.0, %v849
        %v851 = vpop.f32.mrb[0].mxu0
        %852 = vdwg.mxu0
        %s853 = scalar_lea.vmem %s3, 8
        %v854 = vld [vmem:[%s853] sm:$0xff]
        %v856 = vsel %vm525, %v850, 0
        %858 = vmatprep.subr.mxu0 0.0
        %859 = vmatpush1.msra.mxu0 %v854
        %860 = vmatprep.subr.mxu0 0.0
        %861 = vmatpush1.msra.mxu0 0.0
        %862 = vmatprep.subr.mxu0 0.0
        %863 = vmatpush1.msra.mxu0 0.0
        %864 = vmatprep.subr.mxu0 0.0
        %865 = vmatpush1.msra.mxu0 0.0
        %866 = vmatprep.subr.mxu0 0.0
        %867 = vmatpush1.msra.mxu0 0.0
        %868 = vmatprep.subr.mxu0 0.0
        %869 = vmatpush1.msra.mxu0 0.0
        %870 = vmatprep.subr.mxu0 0.0
        %871 = vmatpush1.msra.mxu0 0.0
        %872 = vmatprep.subr.mxu0 0.0
        %873 = vmatpush1.msra.mxu0 0.0
        %874 = vmatprep.subr.mxu0 0.0
        %875 = vmatpush1.msra.mxu0 0.0
        %876 = vmatprep.subr.mxu0 0.0
        %877 = vmatpush1.msra.mxu0 0.0
        %878 = vmatprep.subr.mxu0 0.0
        %879 = vmatpush1.msra.mxu0 0.0
        %880 = vmatprep.subr.mxu0 0.0
        %881 = vmatpush1.msra.mxu0 0.0
        %882 = vmatprep.subr.mxu0 0.0
        %883 = vmatpush1.msra.mxu0 0.0
        %884 = vmatprep.subr.mxu0 0.0
        %885 = vmatpush1.msra.mxu0 0.0
        %886 = vmatprep.subr.mxu0 0.0
        %887 = vmatpush1.msra.mxu0 0.0
        %888 = vmatprep.subr.mxu0 0.0
        %889 = vmatpush1.msra.mxu0 0.0
        %890 = vmatprep.subr.mxu0 0.0
        %891 = vmatpush1.msra.mxu0 0.0
        %892 = vmatprep.subr.mxu0 0.0
        %893 = vmatpush1.msra.mxu0 0.0
        %894 = vmatprep.subr.mxu0 0.0
        %895 = vmatpush1.msra.mxu0 0.0
        %896 = vmatprep.subr.mxu0 0.0
        %897 = vmatpush1.msra.mxu0 0.0
        %898 = vmatprep.subr.mxu0 0.0
        %899 = vmatpush1.msra.mxu0 0.0
        %900 = vmatprep.subr.mxu0 0.0
        %901 = vmatpush1.msra.mxu0 0.0
        %902 = vmatprep.subr.mxu0 0.0
        %903 = vmatpush1.msra.mxu0 0.0
        %904 = vmatprep.subr.mxu0 0.0
        %905 = vmatpush1.msra.mxu0 0.0
        %906 = vmatprep.subr.mxu0 0.0
        %907 = vmatpush1.msra.mxu0 0.0
        %908 = vmatprep.subr.mxu0 0.0
        %909 = vmatpush1.msra.mxu0 0.0
        %910 = vmatprep.subr.mxu0 0.0
        %911 = vmatpush1.msra.mxu0 0.0
        %912 = vmatprep.subr.mxu0 0.0
        %913 = vmatpush1.msra.mxu0 0.0
        %914 = vmatprep.subr.mxu0 0.0
        %915 = vmatpush1.msra.mxu0 0.0
        %916 = vmatprep.subr.mxu0 0.0
        %917 = vmatpush1.msra.mxu0 0.0
        %918 = vmatprep.subr.mxu0 0.0
        %919 = vmatpush1.msra.mxu0 0.0
        %920 = vmatprep.subr.mxu0 0.0
        %921 = vmatpush1.msra.mxu0 0.0
        %922 = vmatprep.mubr.f32.mxu0 0.0
        %923 = vmatmul.mubr.f32.gmra.mrb[0].mxu0 %v856
        %v924 = vpop.f32.mrb[0].mxu0
        %v925 = vadd.f32 0.0, %v924
        %v926 = vpop.f32.mrb[0].mxu0
        %927 = vdwg.mxu0
        %v929 = vsel %vm525, %v684, 0
        %931 = vmatprep.subr.mxu0 0.0
        %932 = vmatpush1.msra.mxu0 %v687
        %933 = vmatprep.subr.mxu0 0.0
        %934 = vmatpush1.msra.mxu0 0.0
        %935 = vmatprep.subr.mxu0 0.0
        %936 = vmatpush1.msra.mxu0 0.0
        %937 = vmatprep.subr.mxu0 0.0
        %938 = vmatpush1.msra.mxu0 0.0
        %939 = vmatprep.subr.mxu0 0.0
        %940 = vmatpush1.msra.mxu0 0.0
        %941 = vmatprep.subr.mxu0 0.0
        %942 = vmatpush1.msra.mxu0 0.0
        %943 = vmatprep.subr.mxu0 0.0
        %944 = vmatpush1.msra.mxu0 0.0
        %945 = vmatprep.subr.mxu0 0.0
        %946 = vmatpush1.msra.mxu0 0.0
        %947 = vmatprep.subr.mxu0 0.0
        %948 = vmatpush1.msra.mxu0 0.0
        %949 = vmatprep.subr.mxu0 0.0
        %950 = vmatpush1.msra.mxu0 0.0
        %951 = vmatprep.subr.mxu0 0.0
        %952 = vmatpush1.msra.mxu0 0.0
        %953 = vmatprep.subr.mxu0 0.0
        %954 = vmatpush1.msra.mxu0 0.0
        %955 = vmatprep.subr.mxu0 0.0
        %956 = vmatpush1.msra.mxu0 0.0
        %957 = vmatprep.subr.mxu0 0.0
        %958 = vmatpush1.msra.mxu0 0.0
        %959 = vmatprep.subr.mxu0 0.0
        %960 = vmatpush1.msra.mxu0 0.0
        %961 = vmatprep.subr.mxu0 0.0
        %962 = vmatpush1.msra.mxu0 0.0
        %963 = vmatprep.subr.mxu0 0.0
        %964 = vmatpush1.msra.mxu0 0.0
        %965 = vmatprep.subr.mxu0 0.0
        %966 = vmatpush1.msra.mxu0 0.0
        %967 = vmatprep.subr.mxu0 0.0
        %968 = vmatpush1.msra.mxu0 0.0
        %969 = vmatprep.subr.mxu0 0.0
        %970 = vmatpush1.msra.mxu0 0.0
        %971 = vmatprep.subr.mxu0 0.0
        %972 = vmatpush1.msra.mxu0 0.0
        %973 = vmatprep.subr.mxu0 0.0
        %974 = vmatpush1.msra.mxu0 0.0
        %975 = vmatprep.subr.mxu0 0.0
        %976 = vmatpush1.msra.mxu0 0.0
        %977 = vmatprep.subr.mxu0 0.0
        %978 = vmatpush1.msra.mxu0 0.0
        %979 = vmatprep.subr.mxu0 0.0
        %980 = vmatpush1.msra.mxu0 0.0
        %981 = vmatprep.subr.mxu0 0.0
        %982 = vmatpush1.msra.mxu0 0.0
        %983 = vmatprep.subr.mxu0 0.0
        %984 = vmatpush1.msra.mxu0 0.0
        %985 = vmatprep.subr.mxu0 0.0
        %986 = vmatpush1.msra.mxu0 0.0
        %987 = vmatprep.subr.mxu0 0.0
        %988 = vmatpush1.msra.mxu0 0.0
        %989 = vmatprep.subr.mxu0 0.0
        %990 = vmatpush1.msra.mxu0 0.0
        %991 = vmatprep.subr.mxu0 0.0
        %992 = vmatpush1.msra.mxu0 0.0
        %993 = vmatprep.subr.mxu0 0.0
        %994 = vmatpush1.msra.mxu0 0.0
        %995 = vmatprep.mubr.f32.mxu0 0.0
        %996 = vmatmul.mubr.f32.gmra.mrb[0].mxu0 %v929
        %v997 = vpop.f32.mrb[0].mxu0
        %v998 = vadd.f32 %v925, %v997
        %v999 = vpop.f32.mrb[0].mxu0
        %1000 = vdwg.mxu0
        %1001 = vrot.lane.b32.xlu0 %v519, 112
        %v1002 = vpop.permute.xlu0 %1001
        %1003 = vrot.lane.b32.xlu0 %v519, 80
        %v1004 = vpop.permute.xlu0 %1003
        %v1005 = vsel %vm525, %v1002, 0
        %v1007 = vsel %vm525, %v1004, 0
        %1009 = vmatprep.subr.mxu0 0.0
        %1010 = vmatpush1.xpose.msra.mxu0 %v1007
        %1011 = vmatprep.subr.mxu0 0.0
        %1012 = vmatpush1.xpose.msra.mxu0 0.0
        %1013 = vmatprep.subr.mxu0 0.0
        %1014 = vmatpush1.xpose.msra.mxu0 0.0
        %1015 = vmatprep.subr.mxu0 0.0
        %1016 = vmatpush1.xpose.msra.mxu0 0.0
        %1017 = vmatprep.subr.mxu0 0.0
        %1018 = vmatpush1.xpose.msra.mxu0 0.0
        %1019 = vmatprep.subr.mxu0 0.0
        %1020 = vmatpush1.xpose.msra.mxu0 0.0
        %1021 = vmatprep.subr.mxu0 0.0
        %1022 = vmatpush1.xpose.msra.mxu0 0.0
        %1023 = vmatprep.subr.mxu0 0.0
        %1024 = vmatpush1.xpose.msra.mxu0 0.0
        %1025 = vmatprep.subr.mxu0 0.0
        %1026 = vmatpush1.xpose.msra.mxu0 0.0
        %1027 = vmatprep.subr.mxu0 0.0
        %1028 = vmatpush1.xpose.msra.mxu0 0.0
        %1029 = vmatprep.subr.mxu0 0.0
        %1030 = vmatpush1.xpose.msra.mxu0 0.0
        %1031 = vmatprep.subr.mxu0 0.0
        %1032 = vmatpush1.xpose.msra.mxu0 0.0
        %1033 = vmatprep.subr.mxu0 0.0
        %1034 = vmatpush1.xpose.msra.mxu0 0.0
        %1035 = vmatprep.subr.mxu0 0.0
        %1036 = vmatpush1.xpose.msra.mxu0 0.0
        %1037 = vmatprep.subr.mxu0 0.0
        %1038 = vmatpush1.xpose.msra.mxu0 0.0
        %1039 = vmatprep.subr.mxu0 0.0
        %1040 = vmatpush1.xpose.msra.mxu0 0.0
        %1041 = vmatprep.subr.mxu0 0.0
        %1042 = vmatpush1.xpose.msra.mxu0 0.0
        %1043 = vmatprep.subr.mxu0 0.0
        %1044 = vmatpush1.xpose.msra.mxu0 0.0
        %1045 = vmatprep.subr.mxu0 0.0
        %1046 = vmatpush1.xpose.msra.mxu0 0.0
        %1047 = vmatprep.subr.mxu0 0.0
        %1048 = vmatpush1.xpose.msra.mxu0 0.0
        %1049 = vmatprep.subr.mxu0 0.0
        %1050 = vmatpush1.xpose.msra.mxu0 0.0
        %1051 = vmatprep.subr.mxu0 0.0
        %1052 = vmatpush1.xpose.msra.mxu0 0.0
        %1053 = vmatprep.subr.mxu0 0.0
        %1054 = vmatpush1.xpose.msra.mxu0 0.0
        %1055 = vmatprep.subr.mxu0 0.0
        %1056 = vmatpush1.xpose.msra.mxu0 0.0
        %1057 = vmatprep.subr.mxu0 0.0
        %1058 = vmatpush1.xpose.msra.mxu0 0.0
        %1059 = vmatprep.subr.mxu0 0.0
        %1060 = vmatpush1.xpose.msra.mxu0 0.0
        %1061 = vmatprep.subr.mxu0 0.0
        %1062 = vmatpush1.xpose.msra.mxu0 0.0
        %1063 = vmatprep.subr.mxu0 0.0
        %1064 = vmatpush1.xpose.msra.mxu0 0.0
        %1065 = vmatprep.subr.mxu0 0.0
        %1066 = vmatpush1.xpose.msra.mxu0 0.0
        %1067 = vmatprep.subr.mxu0 0.0
        %1068 = vmatpush1.xpose.msra.mxu0 0.0
        %1069 = vmatprep.subr.mxu0 0.0
        %1070 = vmatpush1.xpose.msra.mxu0 0.0
        %1071 = vmatprep.subr.mxu0 0.0
        %1072 = vmatpush1.xpose.msra.mxu0 0.0
        %1073 = vmatprep.mubr.f32.mxu0 0.0
        %1074 = vmatmul.mubr.f32.gmra.mrb[0].mxu0 %v1005
        %v1075 = vpop.f32.mrb[0].mxu0
        %v1076 = vadd.f32 0.0, %v1075
        %v1077 = vpop.f32.mrb[0].mxu0
        %1078 = vdwg.mxu0
        %v1079 = vsel %vm525, %v1076, -inf
        %1080 = vmax.xlane.f32.xlu0 %v1079
        %v1081 = vpop.xlane.xlu0 %1080
        %v1082 = vsub.f32 %v1076, %v1081
        %v1083 = vmul.f32 %v1082, 1.442695
        %v1084 = vpow.pop %v1083
        %v1085 = vsel %vm525, %v1084, 0.0
        %1086 = vadd.xlane.f32.xlu0 %v1085
        %v1087 = vpop.xlane.xlu0 %1086
        %v1088 = vrcp.pop %v1087
        %v1089 = vmul.f32 %v1084, %v1088
        %1090 = vrot.lane.b32.xlu0 %v519, 48
        %v1091 = vpop.permute.xlu0 %1090
        %v1094 = vsel %vm525, %v1089, 0
        %1096 = vmatprep.subr.mxu0 0.0
        %1097 = vmatpush1.msra.mxu0 %v1091
        %1098 = vmatprep.subr.mxu0 0.0
        %1099 = vmatpush1.msra.mxu0 0.0
        %1100 = vmatprep.subr.mxu0 0.0
        %1101 = vmatpush1.msra.mxu0 0.0
        %1102 = vmatprep.subr.mxu0 0.0
        %1103 = vmatpush1.msra.mxu0 0.0
        %1104 = vmatprep.subr.mxu0 0.0
        %1105 = vmatpush1.msra.mxu0 0.0
        %1106 = vmatprep.subr.mxu0 0.0
        %1107 = vmatpush1.msra.mxu0 0.0
        %1108 = vmatprep.subr.mxu0 0.0
        %1109 = vmatpush1.msra.mxu0 0.0
        %1110 = vmatprep.subr.mxu0 0.0
        %1111 = vmatpush1.msra.mxu0 0.0
        %1112 = vmatprep.subr.mxu0 0.0
        %1113 = vmatpush1.msra.mxu0 0.0
        %1114 = vmatprep.subr.mxu0 0.0
        %1115 = vmatpush1.msra.mxu0 0.0
        %1116 = vmatprep.subr.mxu0 0.0
        %1117 = vmatpush1.msra.mxu0 0.0
        %1118 = vmatprep.subr.mxu0 0.0
        %1119 = vmatpush1.msra.mxu0 0.0
        %1120 = vmatprep.subr.mxu0 0.0
        %1121 = vmatpush1.msra.mxu0 0.0
        %1122 = vmatprep.subr.mxu0 0.0
        %1123 = vmatpush1.msra.mxu0 0.0
        %1124 = vmatprep.subr.mxu0 0.0
        %1125 = vmatpush1.msra.mxu0 0.0
        %1126 = vmatprep.subr.mxu0 0.0
        %1127 = vmatpush1.msra.mxu0 0.0
        %1128 = vmatprep.subr.mxu0 0.0
        %1129 = vmatpush1.msra.mxu0 0.0
        %1130 = vmatprep.subr.mxu0 0.0
        %1131 = vmatpush1.msra.mxu0 0.0
        %1132 = vmatprep.subr.mxu0 0.0
        %1133 = vmatpush1.msra.mxu0 0.0
        %1134 = vmatprep.subr.mxu0 0.0
        %1135 = vmatpush1.msra.mxu0 0.0
        %1136 = vmatprep.subr.mxu0 0.0
        %1137 = vmatpush1.msra.mxu0 0.0
        %1138 = vmatprep.subr.mxu0 0.0
        %1139 = vmatpush1.msra.mxu0 0.0
        %1140 = vmatprep.subr.mxu0 0.0
        %1141 = vmatpush1.msra.mxu0 0.0
        %1142 = vmatprep.subr.mxu0 0.0
        %1143 = vmatpush1.msra.mxu0 0.0
        %1144 = vmatprep.subr.mxu0 0.0
        %1145 = vmatpush1.msra.mxu0 0.0
        %1146 = vmatprep.subr.mxu0 0.0
        %1147 = vmatpush1.msra.mxu0 0.0
        %1148 = vmatprep.subr.mxu0 0.0
        %1149 = vmatpush1.msra.mxu0 0.0
        %1150 = vmatprep.subr.mxu0 0.0
        %1151 = vmatpush1.msra.mxu0 0.0
        %1152 = vmatprep.subr.mxu0 0.0
        %1153 = vmatpush1.msra.mxu0 0.0
        %1154 = vmatprep.subr.mxu0 0.0
        %1155 = vmatpush1.msra.mxu0 0.0
        %1156 = vmatprep.subr.mxu0 0.0
        %1157 = vmatpush1.msra.mxu0 0.0
        %1158 = vmatprep.subr.mxu0 0.0
        %1159 = vmatpush1.msra.mxu0 0.0
        %1160 = vmatprep.mubr.f32.mxu0 0.0
        %1161 = vmatmul.mubr.f32.gmra.mrb[0].mxu0 %v1094
        %v1162 = vpop.f32.mrb[0].mxu0
        %v1163 = vadd.f32 0.0, %v1162
        %v1164 = vpop.f32.mrb[0].mxu0
        %1165 = vdwg.mxu0
        %s1166 = scalar_lea.vmem %s3, 16
        %v1167 = vld [vmem:[%s1166] sm:$0xff]
        %v1169 = vsel %vm525, %v1163, 0
        %1171 = vmatprep.subr.mxu0 0.0
        %1172 = vmatpush1.msra.mxu0 %v1167
        %1173 = vmatprep.subr.mxu0 0.0
        %1174 = vmatpush1.msra.mxu0 0.0
        %1175 = vmatprep.subr.mxu0 0.0
        %1176 = vmatpush1.msra.mxu0 0.0
        %1177 = vmatprep.subr.mxu0 0.0
        %1178 = vmatpush1.msra.mxu0 0.0
        %1179 = vmatprep.subr.mxu0 0.0
        %1180 = vmatpush1.msra.mxu0 0.0
        %1181 = vmatprep.subr.mxu0 0.0
        %1182 = vmatpush1.msra.mxu0 0.0
        %1183 = vmatprep.subr.mxu0 0.0
        %1184 = vmatpush1.msra.mxu0 0.0
        %1185 = vmatprep.subr.mxu0 0.0
        %1186 = vmatpush1.msra.mxu0 0.0
        %1187 = vmatprep.subr.mxu0 0.0
        %1188 = vmatpush1.msra.mxu0 0.0
        %1189 = vmatprep.subr.mxu0 0.0
        %1190 = vmatpush1.msra.mxu0 0.0
        %1191 = vmatprep.subr.mxu0 0.0
        %1192 = vmatpush1.msra.mxu0 0.0
        %1193 = vmatprep.subr.mxu0 0.0
        %1194 = vmatpush1.msra.mxu0 0.0
        %1195 = vmatprep.subr.mxu0 0.0
        %1196 = vmatpush1.msra.mxu0 0.0
        %1197 = vmatprep.subr.mxu0 0.0
        %1198 = vmatpush1.msra.mxu0 0.0
        %1199 = vmatprep.subr.mxu0 0.0
        %1200 = vmatpush1.msra.mxu0 0.0
        %1201 = vmatprep.subr.mxu0 0.0
        %1202 = vmatpush1.msra.mxu0 0.0
        %1203 = vmatprep.subr.mxu0 0.0
        %1204 = vmatpush1.msra.mxu0 0.0
        %1205 = vmatprep.subr.mxu0 0.0
        %1206 = vmatpush1.msra.mxu0 0.0
        %1207 = vmatprep.subr.mxu0 0.0
        %1208 = vmatpush1.msra.mxu0 0.0
        %1209 = vmatprep.subr.mxu0 0.0
        %1210 = vmatpush1.msra.mxu0 0.0
        %1211 = vmatprep.subr.mxu0 0.0
        %1212 = vmatpush1.msra.mxu0 0.0
        %1213 = vmatprep.subr.mxu0 0.0
        %1214 = vmatpush1.msra.mxu0 0.0
        %1215 = vmatprep.subr.mxu0 0.0
        %1216 = vmatpush1.msra.mxu0 0.0
        %1217 = vmatprep.subr.mxu0 0.0
        %1218 = vmatpush1.msra.mxu0 0.0
        %1219 = vmatprep.subr.mxu0 0.0
        %1220 = vmatpush1.msra.mxu0 0.0
        %1221 = vmatprep.subr.mxu0 0.0
        %1222 = vmatpush1.msra.mxu0 0.0
        %1223 = vmatprep.subr.mxu0 0.0
        %1224 = vmatpush1.msra.mxu0 0.0
        %1225 = vmatprep.subr.mxu0 0.0
        %1226 = vmatpush1.msra.mxu0 0.0
        %1227 = vmatprep.subr.mxu0 0.0
        %1228 = vmatpush1.msra.mxu0 0.0
        %1229 = vmatprep.subr.mxu0 0.0
        %1230 = vmatpush1.msra.mxu0 0.0
        %1231 = vmatprep.subr.mxu0 0.0
        %1232 = vmatpush1.msra.mxu0 0.0
        %1233 = vmatprep.subr.mxu0 0.0
        %1234 = vmatpush1.msra.mxu0 0.0
        %1235 = vmatprep.mubr.f32.mxu0 0.0
        %1236 = vmatmul.mubr.f32.gmra.mrb[0].mxu0 %v1169
        %v1237 = vpop.f32.mrb[0].mxu0
        %v1238 = vadd.f32 0.0, %v1237
        %v1239 = vpop.f32.mrb[0].mxu0
        %1240 = vdwg.mxu0
        %v1241 = vadd.f32 %v998, %v1238
        %1242 = vrot.lane.b32.xlu0 %v519, 104
        %v1243 = vpop.permute.xlu0 %1242
        %1244 = vrot.lane.b32.xlu0 %v519, 72
        %v1245 = vpop.permute.xlu0 %1244
        %v1246 = vsel %vm525, %v1243, 0
        %v1248 = vsel %vm525, %v1245, 0
        %1250 = vmatprep.subr.mxu0 0.0
        %1251 = vmatpush1.xpose.msra.mxu0 %v1248
        %1252 = vmatprep.subr.mxu0 0.0
        %1253 = vmatpush1.xpose.msra.mxu0 0.0
        %1254 = vmatprep.subr.mxu0 0.0
        %1255 = vmatpush1.xpose.msra.mxu0 0.0
        %1256 = vmatprep.subr.mxu0 0.0
        %1257 = vmatpush1.xpose.msra.mxu0 0.0
        %1258 = vmatprep.subr.mxu0 0.0
        %1259 = vmatpush1.xpose.msra.mxu0 0.0
        %1260 = vmatprep.subr.mxu0 0.0
        %1261 = vmatpush1.xpose.msra.mxu0 0.0
        %1262 = vmatprep.subr.mxu0 0.0
        %1263 = vmatpush1.xpose.msra.mxu0 0.0
        %1264 = vmatprep.subr.mxu0 0.0
        %1265 = vmatpush1.xpose.msra.mxu0 0.0
        %1266 = vmatprep.subr.mxu0 0.0
        %1267 = vmatpush1.xpose.msra.mxu0 0.0
        %1268 = vmatprep.subr.mxu0 0.0
        %1269 = vmatpush1.xpose.msra.mxu0 0.0
        %1270 = vmatprep.subr.mxu0 0.0
        %1271 = vmatpush1.xpose.msra.mxu0 0.0
        %1272 = vmatprep.subr.mxu0 0.0
        %1273 = vmatpush1.xpose.msra.mxu0 0.0
        %1274 = vmatprep.subr.mxu0 0.0
        %1275 = vmatpush1.xpose.msra.mxu0 0.0
        %1276 = vmatprep.subr.mxu0 0.0
        %1277 = vmatpush1.xpose.msra.mxu0 0.0
        %1278 = vmatprep.subr.mxu0 0.0
        %1279 = vmatpush1.xpose.msra.mxu0 0.0
        %1280 = vmatprep.subr.mxu0 0.0
        %1281 = vmatpush1.xpose.msra.mxu0 0.0
        %1282 = vmatprep.subr.mxu0 0.0
        %1283 = vmatpush1.xpose.msra.mxu0 0.0
        %1284 = vmatprep.subr.mxu0 0.0
        %1285 = vmatpush1.xpose.msra.mxu0 0.0
        %1286 = vmatprep.subr.mxu0 0.0
        %1287 = vmatpush1.xpose.msra.mxu0 0.0
        %1288 = vmatprep.subr.mxu0 0.0
        %1289 = vmatpush1.xpose.msra.mxu0 0.0
        %1290 = vmatprep.subr.mxu0 0.0
        %1291 = vmatpush1.xpose.msra.mxu0 0.0
        %1292 = vmatprep.subr.mxu0 0.0
        %1293 = vmatpush1.xpose.msra.mxu0 0.0
        %1294 = vmatprep.subr.mxu0 0.0
        %1295 = vmatpush1.xpose.msra.mxu0 0.0
        %1296 = vmatprep.subr.mxu0 0.0
        %1297 = vmatpush1.xpose.msra.mxu0 0.0
        %1298 = vmatprep.subr.mxu0 0.0
        %1299 = vmatpush1.xpose.msra.mxu0 0.0
        %1300 = vmatprep.subr.mxu0 0.0
        %1301 = vmatpush1.xpose.msra.mxu0 0.0
        %1302 = vmatprep.subr.mxu0 0.0
        %1303 = vmatpush1.xpose.msra.mxu0 0.0
        %1304 = vmatprep.subr.mxu0 0.0
        %1305 = vmatpush1.xpose.msra.mxu0 0.0
        %1306 = vmatprep.subr.mxu0 0.0
        %1307 = vmatpush1.xpose.msra.mxu0 0.0
        %1308 = vmatprep.subr.mxu0 0.0
        %1309 = vmatpush1.xpose.msra.mxu0 0.0
        %1310 = vmatprep.subr.mxu0 0.0
        %1311 = vmatpush1.xpose.msra.mxu0 0.0
        %1312 = vmatprep.subr.mxu0 0.0
        %1313 = vmatpush1.xpose.msra.mxu0 0.0
        %1314 = vmatprep.mubr.f32.mxu0 0.0
        %1315 = vmatmul.mubr.f32.gmra.mrb[0].mxu0 %v1246
        %v1316 = vpop.f32.mrb[0].mxu0
        %v1317 = vadd.f32 0.0, %v1316
        %v1318 = vpop.f32.mrb[0].mxu0
        %1319 = vdwg.mxu0
        %v1320 = vsel %vm525, %v1317, -inf
        %1321 = vmax.xlane.f32.xlu0 %v1320
        %v1322 = vpop.xlane.xlu0 %1321
        %v1323 = vsub.f32 %v1317, %v1322
        %v1324 = vmul.f32 %v1323, 1.442695
        %v1325 = vpow.pop %v1324
        %v1326 = vsel %vm525, %v1325, 0.0
        %1327 = vadd.xlane.f32.xlu0 %v1326
        %v1328 = vpop.xlane.xlu0 %1327
        %v1329 = vrcp.pop %v1328
        %v1330 = vmul.f32 %v1325, %v1329
        %1331 = vrot.lane.b32.xlu0 %v519, 40
        %v1332 = vpop.permute.xlu0 %1331
        %v1335 = vsel %vm525, %v1330, 0
        %1337 = vmatprep.subr.mxu0 0.0
        %1338 = vmatpush1.msra.mxu0 %v1332
        %1339 = vmatprep.subr.mxu0 0.0
        %1340 = vmatpush1.msra.mxu0 0.0
        %1341 = vmatprep.subr.mxu0 0.0
        %1342 = vmatpush1.msra.mxu0 0.0
        %1343 = vmatprep.subr.mxu0 0.0
        %1344 = vmatpush1.msra.mxu0 0.0
        %1345 = vmatprep.subr.mxu0 0.0
        %1346 = vmatpush1.msra.mxu0 0.0
        %1347 = vmatprep.subr.mxu0 0.0
        %1348 = vmatpush1.msra.mxu0 0.0
        %1349 = vmatprep.subr.mxu0 0.0
        %1350 = vmatpush1.msra.mxu0 0.0
        %1351 = vmatprep.subr.mxu0 0.0
        %1352 = vmatpush1.msra.mxu0 0.0
        %1353 = vmatprep.subr.mxu0 0.0
        %1354 = vmatpush1.msra.mxu0 0.0
        %1355 = vmatprep.subr.mxu0 0.0
        %1356 = vmatpush1.msra.mxu0 0.0
        %1357 = vmatprep.subr.mxu0 0.0
        %1358 = vmatpush1.msra.mxu0 0.0
        %1359 = vmatprep.subr.mxu0 0.0
        %1360 = vmatpush1.msra.mxu0 0.0
        %1361 = vmatprep.subr.mxu0 0.0
        %1362 = vmatpush1.msra.mxu0 0.0
        %1363 = vmatprep.subr.mxu0 0.0
        %1364 = vmatpush1.msra.mxu0 0.0
        %1365 = vmatprep.subr.mxu0 0.0
        %1366 = vmatpush1.msra.mxu0 0.0
        %1367 = vmatprep.subr.mxu0 0.0
        %1368 = vmatpush1.msra.mxu0 0.0
        %1369 = vmatprep.subr.mxu0 0.0
        %1370 = vmatpush1.msra.mxu0 0.0
        %1371 = vmatprep.subr.mxu0 0.0
        %1372 = vmatpush1.msra.mxu0 0.0
        %1373 = vmatprep.subr.mxu0 0.0
        %1374 = vmatpush1.msra.mxu0 0.0
        %1375 = vmatprep.subr.mxu0 0.0
        %1376 = vmatpush1.msra.mxu0 0.0
        %1377 = vmatprep.subr.mxu0 0.0
        %1378 = vmatpush1.msra.mxu0 0.0
        %1379 = vmatprep.subr.mxu0 0.0
        %1380 = vmatpush1.msra.mxu0 0.0
        %1381 = vmatprep.subr.mxu0 0.0
        %1382 = vmatpush1.msra.mxu0 0.0
        %1383 = vmatprep.subr.mxu0 0.0
        %1384 = vmatpush1.msra.mxu0 0.0
        %1385 = vmatprep.subr.mxu0 0.0
        %1386 = vmatpush1.msra.mxu0 0.0
        %1387 = vmatprep.subr.mxu0 0.0
        %1388 = vmatpush1.msra.mxu0 0.0
        %1389 = vmatprep.subr.mxu0 0.0
        %1390 = vmatpush1.msra.mxu0 0.0
        %1391 = vmatprep.subr.mxu0 0.0
        %1392 = vmatpush1.msra.mxu0 0.0
        %1393 = vmatprep.subr.mxu0 0.0
        %1394 = vmatpush1.msra.mxu0 0.0
        %1395 = vmatprep.subr.mxu0 0.0
        %1396 = vmatpush1.msra.mxu0 0.0
        %1397 = vmatprep.subr.mxu0 0.0
        %1398 = vmatpush1.msra.mxu0 0.0
        %1399 = vmatprep.subr.mxu0 0.0
        %1400 = vmatpush1.msra.mxu0 0.0
        %1401 = vmatprep.mubr.f32.mxu0 0.0
        %1402 = vmatmul.mubr.f32.gmra.mrb[0].mxu0 %v1335
        %v1403 = vpop.f32.mrb[0].mxu0
        %v1404 = vadd.f32 0.0, %v1403
        %v1405 = vpop.f32.mrb[0].mxu0
        %1406 = vdwg.mxu0
        %s1407 = scalar_lea.vmem %s3, 24
        %v1408 = vld [vmem:[%s1407] sm:$0xff]
        %v1410 = vsel %vm525, %v1404, 0
        %1412 = vmatprep.subr.mxu0 0.0
        %1413 = vmatpush1.msra.mxu0 %v1408
        %1414 = vmatprep.subr.mxu0 0.0
        %1415 = vmatpush1.msra.mxu0 0.0
        %1416 = vmatprep.subr.mxu0 0.0
        %1417 = vmatpush1.msra.mxu0 0.0
        %1418 = vmatprep.subr.mxu0 0.0
        %1419 = vmatpush1.msra.mxu0 0.0
        %1420 = vmatprep.subr.mxu0 0.0
        %1421 = vmatpush1.msra.mxu0 0.0
        %1422 = vmatprep.subr.mxu0 0.0
        %1423 = vmatpush1.msra.mxu0 0.0
        %1424 = vmatprep.subr.mxu0 0.0
        %1425 = vmatpush1.msra.mxu0 0.0
        %1426 = vmatprep.subr.mxu0 0.0
        %1427 = vmatpush1.msra.mxu0 0.0
        %1428 = vmatprep.subr.mxu0 0.0
        %1429 = vmatpush1.msra.mxu0 0.0
        %1430 = vmatprep.subr.mxu0 0.0
        %1431 = vmatpush1.msra.mxu0 0.0
        %1432 = vmatprep.subr.mxu0 0.0
        %1433 = vmatpush1.msra.mxu0 0.0
        %1434 = vmatprep.subr.mxu0 0.0
        %1435 = vmatpush1.msra.mxu0 0.0
        %1436 = vmatprep.subr.mxu0 0.0
        %1437 = vmatpush1.msra.mxu0 0.0
        %1438 = vmatprep.subr.mxu0 0.0
        %1439 = vmatpush1.msra.mxu0 0.0
        %1440 = vmatprep.subr.mxu0 0.0
        %1441 = vmatpush1.msra.mxu0 0.0
        %1442 = vmatprep.subr.mxu0 0.0
        %1443 = vmatpush1.msra.mxu0 0.0
        %1444 = vmatprep.subr.mxu0 0.0
        %1445 = vmatpush1.msra.mxu0 0.0
        %1446 = vmatprep.subr.mxu0 0.0
        %1447 = vmatpush1.msra.mxu0 0.0
        %1448 = vmatprep.subr.mxu0 0.0
        %1449 = vmatpush1.msra.mxu0 0.0
        %1450 = vmatprep.subr.mxu0 0.0
        %1451 = vmatpush1.msra.mxu0 0.0
        %1452 = vmatprep.subr.mxu0 0.0
        %1453 = vmatpush1.msra.mxu0 0.0
        %1454 = vmatprep.subr.mxu0 0.0
        %1455 = vmatpush1.msra.mxu0 0.0
        %1456 = vmatprep.subr.mxu0 0.0
        %1457 = vmatpush1.msra.mxu0 0.0
        %1458 = vmatprep.subr.mxu0 0.0
        %1459 = vmatpush1.msra.mxu0 0.0
        %1460 = vmatprep.subr.mxu0 0.0
        %1461 = vmatpush1.msra.mxu0 0.0
        %1462 = vmatprep.subr.mxu0 0.0
        %1463 = vmatpush1.msra.mxu0 0.0
        %1464 = vmatprep.subr.mxu0 0.0
        %1465 = vmatpush1.msra.mxu0 0.0
        %1466 = vmatprep.subr.mxu0 0.0
        %1467 = vmatpush1.msra.mxu0 0.0
        %1468 = vmatprep.subr.mxu0 0.0
        %1469 = vmatpush1.msra.mxu0 0.0
        %1470 = vmatprep.subr.mxu0 0.0
        %1471 = vmatpush1.msra.mxu0 0.0
        %1472 = vmatprep.subr.mxu0 0.0
        %1473 = vmatpush1.msra.mxu0 0.0
        %1474 = vmatprep.subr.mxu0 0.0
        %1475 = vmatpush1.msra.mxu0 0.0
        %1476 = vmatprep.mubr.f32.mxu0 0.0
        %1477 = vmatmul.mubr.f32.gmra.mrb[0].mxu0 %v1410
        %v1478 = vpop.f32.mrb[0].mxu0
        %v1479 = vadd.f32 0.0, %v1478
        %v1480 = vpop.f32.mrb[0].mxu0
        %1481 = vdwg.mxu0
        %v1482 = vadd.f32 %v1241, %v1479
        %v1483 = vld [vmem:[%s4] sm:$0x1]
        %v1485 = vlaneseq
        %v1486 = vshrl.u32 %v1485, 7
        %v1487 = vsub.s32 0, %v1486
        %v1488 = vrot.slane %v1483, %v1487
        %v1490 = vadd.f32 %v1482, %v1488
        %v1491 = vadd.f32 %v436, %v1490
        %v1492 = vsel %vm448, %v1491, 0.0
        %1493 = vadd.xlane.f32.xlu0 %v1492
        %v1494 = vpop.xlane.xlu0 %1493
        %v1495 = vrcp.pop 32.0
        %v1496 = vmul.f32 %v1494, %v1495
        %v1497 = vsub.f32 %v1491, %v1496
        %v1498 = vmul.f32 %v1497, %v1497
        %v1499 = vsel %vm448, %v1498, 0.0
        %1500 = vadd.xlane.f32.xlu0 %v1499
        %v1501 = vpop.xlane.xlu0 %1500
        %v1502 = vmul.f32 %v1501, %v1495
        %v1503 = vadd.f32 %v1502, 1e-05
        %v1504 = vrsqrt.pop %v1503
        %v1505 = vmul.f32 %v1497, %v1504
        %v1506 = vld [vmem:[%s5] sm:$0x1]
        %v1508 = vlaneseq
        %v1509 = vshrl.u32 %v1508, 7
        %v1510 = vsub.s32 0, %v1509
        %v1511 = vrot.slane %v1506, %v1510
        %v1513 = vmul.f32 %v1505, %v1511
        %v1514 = vld [vmem:[%s6] sm:$0x1]
        %v1516 = vlaneseq
        %v1517 = vshrl.u32 %v1516, 7
        %v1518 = vsub.s32 0, %v1517
        %v1519 = vrot.slane %v1514, %v1518
        %v1521 = vadd.f32 %v1513, %v1519
        %v1522 = vld [vmem:[%s7] sm:$0xff]
        %v1523 = vld [vmem:[%s7 + $0x8] sm:$0xff]
        %v1524 = vld [vmem:[%s7 + $0x10] sm:$0xff]
        %v1525 = vld [vmem:[%s7 + $0x18] sm:$0xff]
        %v1526 = vld [vmem:[%s8] sm:$0x1]
        %v1528 = vlaneseq
        %v1529 = vshrl.u32 %v1528, 7
        %v1530 = vsub.s32 0, %v1529
        %v1531 = vrot.slane %v1526, %v1530
        %v1534 = vsel %vm448, %v1521, 0
        %1536 = vmatprep.subr.mxu0 0.0
        %1537 = vmatpush1.msra.mxu0 %v1522
        %1538 = vmatprep.subr.mxu0 0.0
        %1539 = vmatpush1.msra.mxu0 %v1523
        %1540 = vmatprep.subr.mxu0 0.0
        %1541 = vmatpush1.msra.mxu0 %v1524
        %1542 = vmatprep.subr.mxu0 0.0
        %1543 = vmatpush1.msra.mxu0 %v1525
        %1544 = vmatprep.subr.mxu0 0.0
        %1545 = vmatpush1.msra.mxu0 0.0
        %1546 = vmatprep.subr.mxu0 0.0
        %1547 = vmatpush1.msra.mxu0 0.0
        %1548 = vmatprep.subr.mxu0 0.0
        %1549 = vmatpush1.msra.mxu0 0.0
        %1550 = vmatprep.subr.mxu0 0.0
        %1551 = vmatpush1.msra.mxu0 0.0
        %1552 = vmatprep.subr.mxu0 0.0
        %1553 = vmatpush1.msra.mxu0 0.0
        %1554 = vmatprep.subr.mxu0 0.0
        %1555 = vmatpush1.msra.mxu0 0.0
        %1556 = vmatprep.subr.mxu0 0.0
        %1557 = vmatpush1.msra.mxu0 0.0
        %1558 = vmatprep.subr.mxu0 0.0
        %1559 = vmatpush1.msra.mxu0 0.0
        %1560 = vmatprep.subr.mxu0 0.0
        %1561 = vmatpush1.msra.mxu0 0.0
        %1562 = vmatprep.subr.mxu0 0.0
        %1563 = vmatpush1.msra.mxu0 0.0
        %1564 = vmatprep.subr.mxu0 0.0
        %1565 = vmatpush1.msra.mxu0 0.0
        %1566 = vmatprep.subr.mxu0 0.0
        %1567 = vmatpush1.msra.mxu0 0.0
        %1568 = vmatprep.subr.mxu0 0.0
        %1569 = vmatpush1.msra.mxu0 0.0
        %1570 = vmatprep.subr.mxu0 0.0
        %1571 = vmatpush1.msra.mxu0 0.0
        %1572 = vmatprep.subr.mxu0 0.0
        %1573 = vmatpush1.msra.mxu0 0.0
        %1574 = vmatprep.subr.mxu0 0.0
        %1575 = vmatpush1.msra.mxu0 0.0
        %1576 = vmatprep.subr.mxu0 0.0
        %1577 = vmatpush1.msra.mxu0 0.0
        %1578 = vmatprep.subr.mxu0 0.0
        %1579 = vmatpush1.msra.mxu0 0.0
        %1580 = vmatprep.subr.mxu0 0.0
        %1581 = vmatpush1.msra.mxu0 0.0
        %1582 = vmatprep.subr.mxu0 0.0
        %1583 = vmatpush1.msra.mxu0 0.0
        %1584 = vmatprep.subr.mxu0 0.0
        %1585 = vmatpush1.msra.mxu0 0.0
        %1586 = vmatprep.subr.mxu0 0.0
        %1587 = vmatpush1.msra.mxu0 0.0
        %1588 = vmatprep.subr.mxu0 0.0
        %1589 = vmatpush1.msra.mxu0 0.0
        %1590 = vmatprep.subr.mxu0 0.0
        %1591 = vmatpush1.msra.mxu0 0.0
        %1592 = vmatprep.subr.mxu0 0.0
        %1593 = vmatpush1.msra.mxu0 0.0
        %1594 = vmatprep.subr.mxu0 0.0
        %1595 = vmatpush1.msra.mxu0 0.0
        %1596 = vmatprep.subr.mxu0 0.0
        %1597 = vmatpush1.msra.mxu0 0.0
        %1598 = vmatprep.subr.mxu0 0.0
        %1599 = vmatpush1.msra.mxu0 0.0
        %1600 = vmatprep.mubr.f32.mxu0 0.0
        %1601 = vmatmul.mubr.f32.gmra.mrb[0].mxu0 %v1534
        %v1602 = vpop.f32.mrb[0].mxu0
        %v1603 = vadd.f32 %v1531, %v1602
        %v1604 = vpop.f32.mrb[0].mxu0
        %1605 = vdwg.mxu0
        %v1606 = vmax.f32 %v1603, 0.0
        %v1607 = vld [vmem:[%s9] sm:$0xff]
        %v1608 = vld [vmem:[%s9 + $0x8] sm:$0xff]
        %v1609 = vld [vmem:[%s9 + $0x10] sm:$0xff]
        %v1610 = vld [vmem:[%s9 + $0x18] sm:$0xff]
        %v1611 = vld [vmem:[%s9 + $0x20] sm:$0xff]
        %v1612 = vld [vmem:[%s9 + $0x28] sm:$0xff]
        %v1613 = vld [vmem:[%s9 + $0x30] sm:$0xff]
        %v1614 = vld [vmem:[%s9 + $0x38] sm:$0xff]
        %v1615 = vld [vmem:[%s9 + $0x40] sm:$0xff]
        %v1616 = vld [vmem:[%s9 + $0x48] sm:$0xff]
        %v1617 = vld [vmem:[%s9 + $0x50] sm:$0xff]
        %v1618 = vld [vmem:[%s9 + $0x58] sm:$0xff]
        %v1619 = vld [vmem:[%s9 + $0x60] sm:$0xff]
        %v1620 = vld [vmem:[%s9 + $0x68] sm:$0xff]
        %v1621 = vld [vmem:[%s9 + $0x70] sm:$0xff]
        %v1622 = vld [vmem:[%s9 + $0x78] sm:$0xff]
        %v1623 = vld [vmem:[%s10] sm:$0x1]
        %v1625 = vlaneseq
        %v1626 = vshrl.u32 %v1625, 7
        %v1627 = vsub.s32 0, %v1626
        %v1628 = vrot.slane %v1623, %v1627
        %1630 = vmatprep.subr.mxu0 0.0
        %1631 = vmatpush1.msra.mxu0 %v1607
        %1632 = vmatprep.subr.mxu0 0.0
        %1633 = vmatpush1.msra.mxu0 %v1608
        %1634 = vmatprep.subr.mxu0 0.0
        %1635 = vmatpush1.msra.mxu0 %v1609
        %1636 = vmatprep.subr.mxu0 0.0
        %1637 = vmatpush1.msra.mxu0 %v1610
        %1638 = vmatprep.subr.mxu0 0.0
        %1639 = vmatpush1.msra.mxu0 %v1611
        %1640 = vmatprep.subr.mxu0 0.0
        %1641 = vmatpush1.msra.mxu0 %v1612
        %1642 = vmatprep.subr.mxu0 0.0
        %1643 = vmatpush1.msra.mxu0 %v1613
        %1644 = vmatprep.subr.mxu0 0.0
        %1645 = vmatpush1.msra.mxu0 %v1614
        %1646 = vmatprep.subr.mxu0 0.0
        %1647 = vmatpush1.msra.mxu0 %v1615
        %1648 = vmatprep.subr.mxu0 0.0
        %1649 = vmatpush1.msra.mxu0 %v1616
        %1650 = vmatprep.subr.mxu0 0.0
        %1651 = vmatpush1.msra.mxu0 %v1617
        %1652 = vmatprep.subr.mxu0 0.0
        %1653 = vmatpush1.msra.mxu0 %v1618
        %1654 = vmatprep.subr.mxu0 0.0
        %1655 = vmatpush1.msra.mxu0 %v1619
        %1656 = vmatprep.subr.mxu0 0.0
        %1657 = vmatpush1.msra.mxu0 %v1620
        %1658 = vmatprep.subr.mxu0 0.0
        %1659 = vmatpush1.msra.mxu0 %v1621
        %1660 = vmatprep.subr.mxu0 0.0
        %1661 = vmatpush1.msra.mxu0 %v1622
        %1662 = vmatprep.subr.mxu0 0.0
        %1663 = vmatpush1.msra.mxu0 0.0
        %1664 = vmatprep.subr.mxu0 0.0
        %1665 = vmatpush1.msra.mxu0 0.0
        %1666 = vmatprep.subr.mxu0 0.0
        %1667 = vmatpush1.msra.mxu0 0.0
        %1668 = vmatprep.subr.mxu0 0.0
        %1669 = vmatpush1.msra.mxu0 0.0
        %1670 = vmatprep.subr.mxu0 0.0
        %1671 = vmatpush1.msra.mxu0 0.0
        %1672 = vmatprep.subr.mxu0 0.0
        %1673 = vmatpush1.msra.mxu0 0.0
        %1674 = vmatprep.subr.mxu0 0.0
        %1675 = vmatpush1.msra.mxu0 0.0
        %1676 = vmatprep.subr.mxu0 0.0
        %1677 = vmatpush1.msra.mxu0 0.0
        %1678 = vmatprep.subr.mxu0 0.0
        %1679 = vmatpush1.msra.mxu0 0.0
        %1680 = vmatprep.subr.mxu0 0.0
        %1681 = vmatpush1.msra.mxu0 0.0
        %1682 = vmatprep.subr.mxu0 0.0
        %1683 = vmatpush1.msra.mxu0 0.0
        %1684 = vmatprep.subr.mxu0 0.0
        %1685 = vmatpush1.msra.mxu0 0.0
        %1686 = vmatprep.subr.mxu0 0.0
        %1687 = vmatpush1.msra.mxu0 0.0
        %1688 = vmatprep.subr.mxu0 0.0
        %1689 = vmatpush1.msra.mxu0 0.0
        %1690 = vmatprep.subr.mxu0 0.0
        %1691 = vmatpush1.msra.mxu0 0.0
        %1692 = vmatprep.subr.mxu0 0.0
        %1693 = vmatpush1.msra.mxu0 0.0
        %1694 = vmatprep.mubr.f32.mxu0 0.0
        %1695 = vmatmul.mubr.f32.gmra.mrb[0].mxu0 %v1606
        %v1696 = vpop.f32.mrb[0].mxu0
        %v1697 = vadd.f32 %v1628, %v1696
        %v1698 = vpop.f32.mrb[0].mxu0
        %1699 = vdwg.mxu0
        %v1700 = vadd.f32 %v1521, %v1697
        %v1701 = vsel %vm448, %v1700, 0.0
        %1702 = vadd.xlane.f32.xlu0 %v1701
        %v1703 = vpop.xlane.xlu0 %1702
        %v1704 = vmul.f32 %v1703, %v1495
        %v1705 = vsub.f32 %v1700, %v1704
        %v1706 = vmul.f32 %v1705, %v1705
        %v1707 = vsel %vm448, %v1706, 0.0
        %1708 = vadd.xlane.f32.xlu0 %v1707
        %v1709 = vpop.xlane.xlu0 %1708
        %v1710 = vmul.f32 %v1709, %v1495
        %v1711 = vadd.f32 %v1710, 1e-05
        %v1712 = vrsqrt.pop %v1711
        %v1713 = vmul.f32 %v1705, %v1712
        %v1714 = vld [vmem:[%s11] sm:$0x1]
        %v1716 = vlaneseq
        %v1717 = vshrl.u32 %v1716, 7
        %v1718 = vsub.s32 0, %v1717
        %v1719 = vrot.slane %v1714, %v1718
        %v1721 = vmul.f32 %v1713, %v1719
        %v1722 = vld [vmem:[%s12] sm:$0x1]
        %v1724 = vlaneseq
        %v1725 = vshrl.u32 %v1724, 7
        %v1726 = vsub.s32 0, %v1725
        %v1727 = vrot.slane %v1722, %v1726
        %v1729 = vadd.f32 %v1721, %v1727
        %1730 = vst.msk [vmem:[%s431] sm:$0xff] %vm448, %v1729
        %s1731 = sand.u32 %s313, 1
        %s1732 = scalar_lea.sflag [#allocation3], %s1731
        %s1733 = sand.u32 %s313, 1
        %s1734 = smul.addr %s1733, 8
        %s1735 = scalar_lea.vmem [#allocation2], %s1734
        // Predicated region
        $region73: #{tpu_custom_call.1} parent=71 // pred_check
          %p1736 = pneg %p323
        $region74: #{tpu_custom_call.1} parent=71 // pred_check_branch
          %1738 = sbr.rel (%p1736) target = $region76
        $region75: #{tpu_custom_call.1} parent=71 // pred_region
          %s1740 = ssub.s32 128, 128
          %1741 = vsyncadd %s1732, %s1740
          %s1742 = smul.addr %s27, 128
          %s1743 = scalar_lea.hbm %s13, %s1742
          %s1745 = sshll.u32 %s1735, 4
          %s1746 = int_to_ptr.vmem [resolvable:$true] %s1745
          %1748 = dma.vmem_to_hbm [thread:$0]  %s1746, 128, %s1743, %s1732
        $region76: #{tpu_custom_call.1} parent=71 // pred_fallthru
          _
      $region72: #{tpu_custom_call.1} parent=5 // pred_fallthru
        _
      %p1749 = scmp.le.s32.totalorder 2, %s22
      // Predicated region
      $region77: #{tpu_custom_call.1} parent=5 // pred_check
        %p1750 = pneg %p1749
      $region78: #{tpu_custom_call.1} parent=5 // pred_check_branch
        %1752 = sbr.rel (%p1750) target = $region80
      $region79: #{tpu_custom_call.1} parent=5 // pred_region
        %s1753 = ssub.s32 %s22, 2
        // Predicated region
        $region81: #{tpu_custom_call.1} parent=79 // pred_check
          %p1754 = pneg %p329
        $region82: #{tpu_custom_call.1} parent=79 // pred_check_branch
          %1756 = sbr.rel (%p1754) target = $region84
        $region83: #{tpu_custom_call.1} parent=79 // pred_region
          %s1757 = sand.u32 %s314, 1
          %s1758 = scalar_lea.sflag [#allocation3], %s1757
          %s1759 = sand.u32 %s314, 1
          %s1760 = smul.addr %s1759, 8
          %s1761 = scalar_lea.vmem [#allocation2], %s1760
          %1762 = dma.done %s1758, 128
        $region84: #{tpu_custom_call.1} parent=79 // pred_fallthru
          _
      $region80: #{tpu_custom_call.1} parent=5 // pred_fallthru
        _
    $region6: #{tpu_custom_call.1} parent=1 // loop_footer
      %s26 = sadd.s32 1, %s22
    $region7: #{tpu_custom_call.1} parent=1 // loop_footer_branch
      %21 = sbr.rel target = $region3
    $region8: #{tpu_custom_call.1} parent=1 // loop_exit
      _
    %1763 = vsyncpa [#allocation3], 1
    %s1764 = scalar_lea.sflag [#allocation3], 1
    %1765 = vsyncpa %s1764, 1

</llo_original>
